<compile_context>
chip_gen: v5e
topology: v5e:2x2
jax: 0.10.0
libtpu: 0.0.40
codegen_flags: <defaults>
</compile_context>

<pallas_src>
import functools
import math

import jax
import jax.numpy as jnp
import numpy as np
from jax.experimental import pallas as pl
from jax.experimental.pallas import tpu as pltpu


# --------------------------------------------------------------------------
# Fused kernel: one grid step == one batch element, all heads inside.
# --------------------------------------------------------------------------
def _nonlocal_kernel(xt_ref, xo_ref, wq_ref, bq_ref, wkv_ref, bkv_ref,
                     wz_ref, shift_ref, z_ref, attn_ref, *, num_heads, head_dim):
    inter = num_heads * head_dim
    xt = xt_ref[0]            # (C, N)  x_thisBranch, channel-major
    xo = xo_ref[0]            # (C, N)  x_otherBranch, channel-major

    # 1x1 convs == channel-major matmuls. query <- x_other; key/value <- x_this
    # (key/value weights concatenated into a single wider matmul).
    q_cn = jnp.dot(wq_ref[...], xo, preferred_element_type=jnp.float32) + bq_ref[...]
    kv_cn = jnp.dot(wkv_ref[...], xt, preferred_element_type=jnp.float32) + bkv_ref[...]
    k_cn = kv_cn[:inter, :]   # (inter, N)
    v_cn = kv_cn[inter:, :]   # (inter, N)

    # Single small transpose so the per-head score matmul is a plain NN matmul.
    q_t = q_cn.T              # (N, inter)

    scale = 1.0 / math.sqrt(head_dim)
    nt_dims = (((1,), (1,)), ((), ()))   # contract last dims (trans_rhs form)

    outs = []
    for h in range(num_heads):            # static unroll; num_heads is tiny
        lo, hi = h * head_dim, (h + 1) * head_dim
        qh = q_t[:, lo:hi]                # (N, D)
        kh = k_cn[lo:hi, :]               # (D, N)
        vh = v_cn[lo:hi, :]               # (D, N)

        s = jnp.dot(qh, kh, preferred_element_type=jnp.float32) * scale   # (N, N)
        m = jnp.max(s, axis=-1, keepdims=True)
        p = jnp.exp(s - m)
        denom = jnp.sum(p, axis=-1, keepdims=True)
        a = p * pl.reciprocal(denom, approx=False)                        # EUP, exact
        attn_ref[0, h, :, :] = a

        # o_h[d, n] = sum_m v[d, m] * a[n, m]   (NT dot, no transposes)
        o_h = jax.lax.dot_general(vh, a, nt_dims,
                                  preferred_element_type=jnp.float32)     # (D, N)
        outs.append(o_h)

    # Channel-major attention output == PyTorch's permute(0,1,3,2).view(B, inter, H, W)
    o_cn = jnp.concatenate(outs, axis=0)                                  # (inter, N)

    # W_z 1x1 conv (BN scale pre-folded into the weight) + BN shift.
    z_ref[0] = (jnp.dot(wz_ref[...], o_cn, preferred_element_type=jnp.float32)
                + shift_ref[...])


def non_local_block(x_this, x_other, params):
    B, C, H, W = x_this.shape
    N = H * W
    num_heads = params["num_heads"]
    inter = params["wq"].shape[0]
    head_dim = inter // num_heads

    # NCHW -> (B, C, N): pure reshape, no transpose / extra HBM pass.
    xt = x_this.reshape(B, C, N)
    xo = x_other.reshape(B, C, N)

    kernel = functools.partial(_nonlocal_kernel,
                               num_heads=num_heads, head_dim=head_dim)

    z_cn, attn = pl.pallas_call(
        kernel,
        out_shape=(
            jax.ShapeDtypeStruct((B, C, N), jnp.float32),
            jax.ShapeDtypeStruct((B, num_heads, N, N), jnp.float32),
        ),
        grid=(B,),
        in_specs=[
            pl.BlockSpec((1, C, N), lambda b: (b, 0, 0)),          # x_this
            pl.BlockSpec((1, C, N), lambda b: (b, 0, 0)),          # x_other
            pl.BlockSpec((inter, C), lambda b: (0, 0)),            # wq
            pl.BlockSpec((inter, 1), lambda b: (0, 0)),            # bq
            pl.BlockSpec((2 * inter, C), lambda b: (0, 0)),        # wkv
            pl.BlockSpec((2 * inter, 1), lambda b: (0, 0)),        # bkv
            pl.BlockSpec((C, inter), lambda b: (0, 0)),            # wz (BN-scaled)
            pl.BlockSpec((C, 1), lambda b: (0, 0)),                # bn shift
        ],
        out_specs=(
            pl.BlockSpec((1, C, N), lambda b: (b, 0, 0)),
            pl.BlockSpec((1, num_heads, N, N), lambda b: (b, 0, 0, 0)),
        ),
        compiler_params=pltpu.CompilerParams(
            dimension_semantics=("parallel",)),
    )(xt, xo, params["wq"], params["bq"], params["wkv"], params["bkv"],
      params["wz_scaled"], params["bn_shift"])

    z = z_cn.reshape(B, C, H, W)
    return z, attn


# --------------------------------------------------------------------------
# One-time host-side parameter preparation (weight concat + BN fold).
# --------------------------------------------------------------------------
def prepare_params(raw):
    inter, C = raw["wq"].shape
    bn_scale = raw["gamma"] / jnp.sqrt(raw["running_var"] + raw["eps"])
    bn_shift = raw["beta"] - raw["running_mean"] * bn_scale
    return {
        "num_heads": raw["num_heads"],
        "wq": raw["wq"],                                    # (inter, C)
        "bq": raw["bq"].reshape(inter, 1),
        "wkv": jnp.concatenate([raw["wk"], raw["wv"]], axis=0),      # (2*inter, C)
        "bkv": jnp.concatenate([raw["bk"], raw["bv"]], axis=0).reshape(2 * inter, 1),
        "wz_scaled": bn_scale[:, None] * raw["wz"],         # BN scale folded into W_z
        "bn_shift": bn_shift.reshape(C, 1),
    }


# --------------------------------------------------------------------------
# Pure-JAX reference mirroring the PyTorch forward (for correctness check).
# --------------------------------------------------------------------------
def non_local_block_ref(x_this, x_other, raw):
    B, C, H, W = x_this.shape
    N = H * W
    num_heads = raw["num_heads"]
    inter = raw["wq"].shape[0]
    head_dim = inter // num_heads

    xt = x_this.reshape(B, C, N)
    xo = x_other.reshape(B, C, N)
    q = jnp.einsum("oc,bcn->bon", raw["wq"], xo) + raw["bq"][None, :, None]
    k = jnp.einsum("oc,bcn->bon", raw["wk"], xt) + raw["bk"][None, :, None]
    v = jnp.einsum("oc,bcn->bon", raw["wv"], xt) + raw["bv"][None, :, None]

    def split(t):   # (B, inter, N) -> (B, heads, N, head_dim), as in the module
        return t.reshape(B, num_heads, head_dim, N).transpose(0, 1, 3, 2)

    qh, kh, vh = split(q), split(k), split(v)
    s = jnp.einsum("bhnd,bhmd->bhnm", qh, kh) / math.sqrt(head_dim)
    attn = jax.nn.softmax(s, axis=-1)
    out = jnp.einsum("bhnm,bhmd->bhnd", attn, vh)
    out_c = out.transpose(0, 1, 3, 2).reshape(B, inter, N)
    z = jnp.einsum("oc,bcn->bon", raw["wz"], out_c)          # conv, bias=False
    bn_scale = raw["gamma"] / jnp.sqrt(raw["running_var"] + raw["eps"])
    bn_shift = raw["beta"] - raw["running_mean"] * bn_scale
    z = z * bn_scale[None, :, None] + bn_shift[None, :, None]
    return z.reshape(B, C, H, W), attn


if __name__ == "__main__":
    # Module config: in_channels=32 -> inter_channels=16, num_heads=4, head_dim=4;
    # input spatial 8x8 -> N=64 tokens.
    B, C, Hs, Ws = 2, 32, 8, 8
    num_heads = 4
    inter = C // 2
    N = Hs * Ws

    key = jax.random.PRNGKey(0)
    ks = jax.random.split(key, 16)
    x_this = jax.random.normal(ks[0], (B, C, Hs, Ws), jnp.float32)
    x_other = jax.random.normal(ks[1], (B, C, Hs, Ws), jnp.float32)

    # Conv weights kept in PyTorch (Cout, Cin) layout for 1x1 convs.
    raw = {
        "num_heads": num_heads,
        "wq": 0.1 * jax.random.normal(ks[2], (inter, C), jnp.float32),
        "bq": 0.1 * jax.random.normal(ks[3], (inter,), jnp.float32),
        "wk": 0.1 * jax.random.normal(ks[4], (inter, C), jnp.float32),
        "bk": 0.1 * jax.random.normal(ks[5], (inter,), jnp.float32),
        "wv": 0.1 * jax.random.normal(ks[6], (inter, C), jnp.float32),
        "bv": 0.1 * jax.random.normal(ks[7], (inter,), jnp.float32),
        "wz": 0.1 * jax.random.normal(ks[8], (C, inter), jnp.float32),   # bias=False
        # Module init sets BN gamma=beta=0 (which zeroes z and makes the z check
        # vacuous); use nonzero BN stats here so the test exercises the full path.
        "gamma": 1.0 + 0.1 * jax.random.normal(ks[9], (C,), jnp.float32),
        "beta": 0.1 * jax.random.normal(ks[10], (C,), jnp.float32),
        "running_mean": 0.1 * jax.random.normal(ks[11], (C,), jnp.float32),
        "running_var": 1.0 + 0.1 * jax.random.uniform(ks[12], (C,), jnp.float32),
        "eps": 1e-5,
    }
    # global_tokens parameter exists in __init__ but is unused in the active
    # forward path (the windowed/global-token branch is commented out).
    _global_tokens = jax.random.normal(ks[13], (1, inter), jnp.float32)

    params = prepare_params(raw)
    z, attn = non_local_block(x_this, x_other, params)
    jax.block_until_ready((z, attn))

    z_ref, attn_ref = non_local_block_ref(x_this, x_other, raw)
    np.testing.assert_allclose(np.asarray(attn), np.asarray(attn_ref),
                               rtol=1e-5, atol=1e-5)
    np.testing.assert_allclose(np.asarray(z), np.asarray(z_ref),
                               rtol=1e-5, atol=1e-5)
    assert z.shape == (B, C, Hs, Ws)
    assert attn.shape == (B, num_heads, N, N)

    print("KERNEL_OK")
</pallas_src>

<mosaic_0001>
module attributes {stable_mosaic.version = 11 : i64} {
  func.func @_nonlocal_kernel(%arg0: i32, %arg1: memref<1x32x64xf32, #tpu.memory_space<vmem>>, %arg2: memref<1x32x64xf32, #tpu.memory_space<vmem>>, %arg3: memref<16x32xf32, #tpu.memory_space<vmem>>, %arg4: memref<16x1xf32, #tpu.memory_space<vmem>>, %arg5: memref<32x32xf32, #tpu.memory_space<vmem>>, %arg6: memref<32x1xf32, #tpu.memory_space<vmem>>, %arg7: memref<32x16xf32, #tpu.memory_space<vmem>>, %arg8: memref<32x1xf32, #tpu.memory_space<vmem>>, %arg9: memref<1x32x64xf32, #tpu.memory_space<vmem>>, %arg10: memref<1x4x64x64xf32, #tpu.memory_space<vmem>>) attributes {dimension_semantics = [#tpu.dimension_semantics<parallel>], iteration_bounds = array<i64: 2>, scalar_prefetch = 0 : i64, scratch_operands = 0 : i64, tpu.core_type = #tpu.core_type<tc>, window_params = [{transform_indices = @transform_0, window_bounds = array<i64: 1, 32, 64>}, {transform_indices = @transform_1, window_bounds = array<i64: 1, 32, 64>}, {pipeline_mode = #tpu.pipeline_mode<synchronous>, transform_indices = @transform_2, window_bounds = array<i64: 16, 32>}, {pipeline_mode = #tpu.pipeline_mode<synchronous>, transform_indices = @transform_3, window_bounds = array<i64: 16, 1>}, {pipeline_mode = #tpu.pipeline_mode<synchronous>, transform_indices = @transform_4, window_bounds = array<i64: 32, 32>}, {pipeline_mode = #tpu.pipeline_mode<synchronous>, transform_indices = @transform_5, window_bounds = array<i64: 32, 1>}, {pipeline_mode = #tpu.pipeline_mode<synchronous>, transform_indices = @transform_6, window_bounds = array<i64: 32, 16>}, {pipeline_mode = #tpu.pipeline_mode<synchronous>, transform_indices = @transform_7, window_bounds = array<i64: 32, 1>}, {transform_indices = @transform_8, window_bounds = array<i64: 1, 32, 64>}, {transform_indices = @transform_9, window_bounds = array<i64: 1, 4, 64, 64>}]} {
    %c0 = arith.constant 0 : index
    %c0_0 = arith.constant 0 : index
    %c0_1 = arith.constant 0 : index
    %0 = vector.load %arg1[%c0, %c0_0, %c0_1] : memref<1x32x64xf32, #tpu.memory_space<vmem>>, vector<1x32x64xf32>
    %1 = vector.shape_cast %0 : vector<1x32x64xf32> to vector<32x64xf32>
    %c0_2 = arith.constant 0 : index
    %c0_3 = arith.constant 0 : index
    %c0_4 = arith.constant 0 : index
    %2 = vector.load %arg2[%c0_2, %c0_3, %c0_4] : memref<1x32x64xf32, #tpu.memory_space<vmem>>, vector<1x32x64xf32>
    %3 = vector.shape_cast %2 : vector<1x32x64xf32> to vector<32x64xf32>
    %c0_5 = arith.constant 0 : index
    %c0_6 = arith.constant 0 : index
    %4 = vector.load %arg3[%c0_5, %c0_6] : memref<16x32xf32, #tpu.memory_space<vmem>>, vector<16x32xf32>
    %cst = arith.constant dense<0.000000e+00> : vector<16x64xf32>
    %5 = tpu.matmul %4, %3, %cst {dimension_numbers = #tpu.dot_dimension_numbers<[1], [0], [0], [1], [0, 0, 1, 1], [], []>} : vector<16x32xf32>, vector<32x64xf32>, vector<16x64xf32> -> vector<16x64xf32>
    %c0_7 = arith.constant 0 : index
    %c0_8 = arith.constant 0 : index
    %6 = vector.load %arg4[%c0_7, %c0_8] : memref<16x1xf32, #tpu.memory_space<vmem>>, vector<16x1xf32>
    %7 = vector.broadcast %6 : vector<16x1xf32> to vector<16x64xf32>
    %8 = arith.addf %5, %7 : vector<16x64xf32>
    %c0_9 = arith.constant 0 : index
    %c0_10 = arith.constant 0 : index
    %9 = vector.load %arg5[%c0_9, %c0_10] : memref<32x32xf32, #tpu.memory_space<vmem>>, vector<32x32xf32>
    %cst_11 = arith.constant dense<0.000000e+00> : vector<32x64xf32>
    %10 = tpu.matmul %9, %1, %cst_11 {dimension_numbers = #tpu.dot_dimension_numbers<[1], [0], [0], [1], [0, 0, 1, 1], [], []>} : vector<32x32xf32>, vector<32x64xf32>, vector<32x64xf32> -> vector<32x64xf32>
    %c0_12 = arith.constant 0 : index
    %c0_13 = arith.constant 0 : index
    %11 = vector.load %arg6[%c0_12, %c0_13] : memref<32x1xf32, #tpu.memory_space<vmem>>, vector<32x1xf32>
    %12 = vector.broadcast %11 : vector<32x1xf32> to vector<32x64xf32>
    %13 = arith.addf %10, %12 : vector<32x64xf32>
    %14 = vector.extract_strided_slice %13 {offsets = [0, 0], sizes = [16, 64], strides = [1, 1]} : vector<32x64xf32> to vector<16x64xf32>
    %15 = vector.extract_strided_slice %13 {offsets = [16, 0], sizes = [16, 64], strides = [1, 1]} : vector<32x64xf32> to vector<16x64xf32>
    %16 = tpu.transpose %8, [1, 0] : vector<16x64xf32> -> vector<64x16xf32>
    %17 = vector.extract_strided_slice %16 {offsets = [0, 0], sizes = [64, 4], strides = [1, 1]} : vector<64x16xf32> to vector<64x4xf32>
    %18 = vector.extract_strided_slice %14 {offsets = [0, 0], sizes = [4, 64], strides = [1, 1]} : vector<16x64xf32> to vector<4x64xf32>
    %19 = vector.extract_strided_slice %15 {offsets = [0, 0], sizes = [4, 64], strides = [1, 1]} : vector<16x64xf32> to vector<4x64xf32>
    %cst_14 = arith.constant dense<0.000000e+00> : vector<64x64xf32>
    %20 = tpu.matmul %17, %18, %cst_14 {dimension_numbers = #tpu.dot_dimension_numbers<[1], [0], [0], [1], [0, 0, 1, 1], [], []>} : vector<64x4xf32>, vector<4x64xf32>, vector<64x64xf32> -> vector<64x64xf32>
    %cst_15 = arith.constant 5.000000e-01 : f32
    %21 = vector.broadcast %cst_15 : f32 to vector<64x64xf32>
    %22 = arith.mulf %20, %21 : vector<64x64xf32>
    %cst_16 = arith.constant dense<0xFF800000> : vector<64xf32>
    %23 = vector.multi_reduction <maximumf>, %22, %cst_16 [1] : vector<64x64xf32> to vector<64xf32>
    %24 = vector.shape_cast %23 : vector<64xf32> to vector<64x1xf32>
    %25 = vector.broadcast %24 : vector<64x1xf32> to vector<64x64xf32>
    %26 = arith.subf %22, %25 : vector<64x64xf32>
    %27 = math.exp %26 : vector<64x64xf32>
    %cst_17 = arith.constant dense<0.000000e+00> : vector<64xf32>
    %28 = vector.multi_reduction <add>, %27, %cst_17 [1] : vector<64x64xf32> to vector<64xf32>
    %29 = vector.shape_cast %28 : vector<64xf32> to vector<64x1xf32>
    %30 = tpu.reciprocal %29 : vector<64x1xf32> -> vector<64x1xf32>
    %31 = vector.broadcast %30 : vector<64x1xf32> to vector<64x64xf32>
    %32 = arith.mulf %27, %31 : vector<64x64xf32>
    %c0_18 = arith.constant 0 : index
    %c0_19 = arith.constant 0 : index
    %c0_20 = arith.constant 0 : index
    %c0_21 = arith.constant 0 : index
    %33 = vector.load %arg10[%c0_18, %c0_19, %c0_20, %c0_21] : memref<1x4x64x64xf32, #tpu.memory_space<vmem>>, vector<1x1x64x64xf32>
    %34 = vector.shape_cast %33 : vector<1x1x64x64xf32> to vector<64x64xf32>
    %35 = vector.shape_cast %32 : vector<64x64xf32> to vector<1x1x64x64xf32>
    tpu.vector_store %arg10[%c0_18, %c0_19, %c0_20, %c0_21], %35 {strides = array<i32>} : memref<1x4x64x64xf32, #tpu.memory_space<vmem>>, vector<1x1x64x64xf32>,
    %cst_22 = arith.constant dense<0.000000e+00> : vector<4x64xf32>
    %36 = tpu.matmul %19, %32, %cst_22 {dimension_numbers = #tpu.dot_dimension_numbers<[1], [1], [0], [0], [0, 0, 1, 0], [], []>} : vector<4x64xf32>, vector<64x64xf32>, vector<4x64xf32> -> vector<4x64xf32>
    %37 = vector.extract_strided_slice %16 {offsets = [0, 4], sizes = [64, 4], strides = [1, 1]} : vector<64x16xf32> to vector<64x4xf32>
    %38 = vector.extract_strided_slice %14 {offsets = [4, 0], sizes = [4, 64], strides = [1, 1]} : vector<16x64xf32> to vector<4x64xf32>
    %39 = vector.extract_strided_slice %15 {offsets = [4, 0], sizes = [4, 64], strides = [1, 1]} : vector<16x64xf32> to vector<4x64xf32>
    %cst_23 = arith.constant dense<0.000000e+00> : vector<64x64xf32>
    %40 = tpu.matmul %37, %38, %cst_23 {dimension_numbers = #tpu.dot_dimension_numbers<[1], [0], [0], [1], [0, 0, 1, 1], [], []>} : vector<64x4xf32>, vector<4x64xf32>, vector<64x64xf32> -> vector<64x64xf32>
    %cst_24 = arith.constant 5.000000e-01 : f32
    %41 = vector.broadcast %cst_24 : f32 to vector<64x64xf32>
    %42 = arith.mulf %40, %41 : vector<64x64xf32>
    %cst_25 = arith.constant dense<0xFF800000> : vector<64xf32>
    %43 = vector.multi_reduction <maximumf>, %42, %cst_25 [1] : vector<64x64xf32> to vector<64xf32>
    %44 = vector.shape_cast %43 : vector<64xf32> to vector<64x1xf32>
    %45 = vector.broadcast %44 : vector<64x1xf32> to vector<64x64xf32>
    %46 = arith.subf %42, %45 : vector<64x64xf32>
    %47 = math.exp %46 : vector<64x64xf32>
    %cst_26 = arith.constant dense<0.000000e+00> : vector<64xf32>
    %48 = vector.multi_reduction <add>, %47, %cst_26 [1] : vector<64x64xf32> to vector<64xf32>
    %49 = vector.shape_cast %48 : vector<64xf32> to vector<64x1xf32>
    %50 = tpu.reciprocal %49 : vector<64x1xf32> -> vector<64x1xf32>
    %51 = vector.broadcast %50 : vector<64x1xf32> to vector<64x64xf32>
    %52 = arith.mulf %47, %51 : vector<64x64xf32>
    %c0_27 = arith.constant 0 : index
    %c1 = arith.constant 1 : index
    %c0_28 = arith.constant 0 : index
    %c0_29 = arith.constant 0 : index
    %53 = vector.load %arg10[%c0_27, %c1, %c0_28, %c0_29] : memref<1x4x64x64xf32, #tpu.memory_space<vmem>>, vector<1x1x64x64xf32>
    %54 = vector.shape_cast %53 : vector<1x1x64x64xf32> to vector<64x64xf32>
    %55 = vector.shape_cast %52 : vector<64x64xf32> to vector<1x1x64x64xf32>
    tpu.vector_store %arg10[%c0_27, %c1, %c0_28, %c0_29], %55 {strides = array<i32>} : memref<1x4x64x64xf32, #tpu.memory_space<vmem>>, vector<1x1x64x64xf32>,
    %cst_30 = arith.constant dense<0.000000e+00> : vector<4x64xf32>
    %56 = tpu.matmul %39, %52, %cst_30 {dimension_numbers = #tpu.dot_dimension_numbers<[1], [1], [0], [0], [0, 0, 1, 0], [], []>} : vector<4x64xf32>, vector<64x64xf32>, vector<4x64xf32> -> vector<4x64xf32>
    %57 = vector.extract_strided_slice %16 {offsets = [0, 8], sizes = [64, 4], strides = [1, 1]} : vector<64x16xf32> to vector<64x4xf32>
    %58 = vector.extract_strided_slice %14 {offsets = [8, 0], sizes = [4, 64], strides = [1, 1]} : vector<16x64xf32> to vector<4x64xf32>
    %59 = vector.extract_strided_slice %15 {offsets = [8, 0], sizes = [4, 64], strides = [1, 1]} : vector<16x64xf32> to vector<4x64xf32>
    %cst_31 = arith.constant dense<0.000000e+00> : vector<64x64xf32>
    %60 = tpu.matmul %57, %58, %cst_31 {dimension_numbers = #tpu.dot_dimension_numbers<[1], [0], [0], [1], [0, 0, 1, 1], [], []>} : vector<64x4xf32>, vector<4x64xf32>, vector<64x64xf32> -> vector<64x64xf32>
    %cst_32 = arith.constant 5.000000e-01 : f32
    %61 = vector.broadcast %cst_32 : f32 to vector<64x64xf32>
    %62 = arith.mulf %60, %61 : vector<64x64xf32>
    %cst_33 = arith.constant dense<0xFF800000> : vector<64xf32>
    %63 = vector.multi_reduction <maximumf>, %62, %cst_33 [1] : vector<64x64xf32> to vector<64xf32>
    %64 = vector.shape_cast %63 : vector<64xf32> to vector<64x1xf32>
    %65 = vector.broadcast %64 : vector<64x1xf32> to vector<64x64xf32>
    %66 = arith.subf %62, %65 : vector<64x64xf32>
    %67 = math.exp %66 : vector<64x64xf32>
    %cst_34 = arith.constant dense<0.000000e+00> : vector<64xf32>
    %68 = vector.multi_reduction <add>, %67, %cst_34 [1] : vector<64x64xf32> to vector<64xf32>
    %69 = vector.shape_cast %68 : vector<64xf32> to vector<64x1xf32>
    %70 = tpu.reciprocal %69 : vector<64x1xf32> -> vector<64x1xf32>
    %71 = vector.broadcast %70 : vector<64x1xf32> to vector<64x64xf32>
    %72 = arith.mulf %67, %71 : vector<64x64xf32>
    %c0_35 = arith.constant 0 : index
    %c2 = arith.constant 2 : index
    %c0_36 = arith.constant 0 : index
    %c0_37 = arith.constant 0 : index
    %73 = vector.load %arg10[%c0_35, %c2, %c0_36, %c0_37] : memref<1x4x64x64xf32, #tpu.memory_space<vmem>>, vector<1x1x64x64xf32>
    %74 = vector.shape_cast %73 : vector<1x1x64x64xf32> to vector<64x64xf32>
    %75 = vector.shape_cast %72 : vector<64x64xf32> to vector<1x1x64x64xf32>
    tpu.vector_store %arg10[%c0_35, %c2, %c0_36, %c0_37], %75 {strides = array<i32>} : memref<1x4x64x64xf32, #tpu.memory_space<vmem>>, vector<1x1x64x64xf32>,
    %cst_38 = arith.constant dense<0.000000e+00> : vector<4x64xf32>
    %76 = tpu.matmul %59, %72, %cst_38 {dimension_numbers = #tpu.dot_dimension_numbers<[1], [1], [0], [0], [0, 0, 1, 0], [], []>} : vector<4x64xf32>, vector<64x64xf32>, vector<4x64xf32> -> vector<4x64xf32>
    %77 = vector.extract_strided_slice %16 {offsets = [0, 12], sizes = [64, 4], strides = [1, 1]} : vector<64x16xf32> to vector<64x4xf32>
    %78 = vector.extract_strided_slice %14 {offsets = [12, 0], sizes = [4, 64], strides = [1, 1]} : vector<16x64xf32> to vector<4x64xf32>
    %79 = vector.extract_strided_slice %15 {offsets = [12, 0], sizes = [4, 64], strides = [1, 1]} : vector<16x64xf32> to vector<4x64xf32>
    %cst_39 = arith.constant dense<0.000000e+00> : vector<64x64xf32>
    %80 = tpu.matmul %77, %78, %cst_39 {dimension_numbers = #tpu.dot_dimension_numbers<[1], [0], [0], [1], [0, 0, 1, 1], [], []>} : vector<64x4xf32>, vector<4x64xf32>, vector<64x64xf32> -> vector<64x64xf32>
    %cst_40 = arith.constant 5.000000e-01 : f32
    %81 = vector.broadcast %cst_40 : f32 to vector<64x64xf32>
    %82 = arith.mulf %80, %81 : vector<64x64xf32>
    %cst_41 = arith.constant dense<0xFF800000> : vector<64xf32>
    %83 = vector.multi_reduction <maximumf>, %82, %cst_41 [1] : vector<64x64xf32> to vector<64xf32>
    %84 = vector.shape_cast %83 : vector<64xf32> to vector<64x1xf32>
    %85 = vector.broadcast %84 : vector<64x1xf32> to vector<64x64xf32>
    %86 = arith.subf %82, %85 : vector<64x64xf32>
    %87 = math.exp %86 : vector<64x64xf32>
    %cst_42 = arith.constant dense<0.000000e+00> : vector<64xf32>
    %88 = vector.multi_reduction <add>, %87, %cst_42 [1] : vector<64x64xf32> to vector<64xf32>
    %89 = vector.shape_cast %88 : vector<64xf32> to vector<64x1xf32>
    %90 = tpu.reciprocal %89 : vector<64x1xf32> -> vector<64x1xf32>
    %91 = vector.broadcast %90 : vector<64x1xf32> to vector<64x64xf32>
    %92 = arith.mulf %87, %91 : vector<64x64xf32>
    %c0_43 = arith.constant 0 : index
    %c3 = arith.constant 3 : index
    %c0_44 = arith.constant 0 : index
    %c0_45 = arith.constant 0 : index
    %93 = vector.load %arg10[%c0_43, %c3, %c0_44, %c0_45] : memref<1x4x64x64xf32, #tpu.memory_space<vmem>>, vector<1x1x64x64xf32>
    %94 = vector.shape_cast %93 : vector<1x1x64x64xf32> to vector<64x64xf32>
    %95 = vector.shape_cast %92 : vector<64x64xf32> to vector<1x1x64x64xf32>
    tpu.vector_store %arg10[%c0_43, %c3, %c0_44, %c0_45], %95 {strides = array<i32>} : memref<1x4x64x64xf32, #tpu.memory_space<vmem>>, vector<1x1x64x64xf32>,
    %cst_46 = arith.constant dense<0.000000e+00> : vector<4x64xf32>
    %96 = tpu.matmul %79, %92, %cst_46 {dimension_numbers = #tpu.dot_dimension_numbers<[1], [1], [0], [0], [0, 0, 1, 0], [], []>} : vector<4x64xf32>, vector<64x64xf32>, vector<4x64xf32> -> vector<4x64xf32>
    %97 = tpu.concatenate %36, %56, %76, %96 in 0 : vector<4x64xf32>, vector<4x64xf32>, vector<4x64xf32>, vector<4x64xf32> -> vector<16x64xf32>
    %c0_47 = arith.constant 0 : index
    %c0_48 = arith.constant 0 : index
    %98 = vector.load %arg7[%c0_47, %c0_48] : memref<32x16xf32, #tpu.memory_space<vmem>>, vector<32x16xf32>
    %cst_49 = arith.constant dense<0.000000e+00> : vector<32x64xf32>
    %99 = tpu.matmul %98, %97, %cst_49 {dimension_numbers = #tpu.dot_dimension_numbers<[1], [0], [0], [1], [0, 0, 1, 1], [], []>} : vector<32x16xf32>, vector<16x64xf32>, vector<32x64xf32> -> vector<32x64xf32>
    %c0_50 = arith.constant 0 : index
    %c0_51 = arith.constant 0 : index
    %100 = vector.load %arg8[%c0_50, %c0_51] : memref<32x1xf32, #tpu.memory_space<vmem>>, vector<32x1xf32>
    %101 = vector.broadcast %100 : vector<32x1xf32> to vector<32x64xf32>
    %102 = arith.addf %99, %101 : vector<32x64xf32>
    %c0_52 = arith.constant 0 : index
    %c0_53 = arith.constant 0 : index
    %c0_54 = arith.constant 0 : index
    %103 = vector.load %arg9[%c0_52, %c0_53, %c0_54] : memref<1x32x64xf32, #tpu.memory_space<vmem>>, vector<1x32x64xf32>
    %104 = vector.shape_cast %103 : vector<1x32x64xf32> to vector<32x64xf32>
    %105 = vector.shape_cast %102 : vector<32x64xf32> to vector<1x32x64xf32>
    tpu.vector_store %arg9[%c0_52, %c0_53, %c0_54], %105 {strides = array<i32>} : memref<1x32x64xf32, #tpu.memory_space<vmem>>, vector<1x32x64xf32>,
    return
  }
  func.func @transform_0(%arg0: i32) -> (i32, i32, i32) {
    %c0_i32 = arith.constant 0 : i32
    %c0_i32_0 = arith.constant 0 : i32
    %c0_i32_1 = arith.constant 0 : i32
    return %arg0, %c0_i32, %c0_i32_0 : i32, i32, i32
  }
  func.func @transform_1(%arg0: i32) -> (i32, i32, i32) {
    %c0_i32 = arith.constant 0 : i32
    %c0_i32_0 = arith.constant 0 : i32
    %c0_i32_1 = arith.constant 0 : i32
    return %arg0, %c0_i32, %c0_i32_0 : i32, i32, i32
  }
  func.func @transform_2(%arg0: i32) -> (i32, i32) {
    %c0_i32 = arith.constant 0 : i32
    %c0_i32_0 = arith.constant 0 : i32
    %c0_i32_1 = arith.constant 0 : i32
    return %c0_i32, %c0_i32_0 : i32, i32
  }
  func.func @transform_3(%arg0: i32) -> (i32, i32) {
    %c0_i32 = arith.constant 0 : i32
    %c0_i32_0 = arith.constant 0 : i32
    %c0_i32_1 = arith.constant 0 : i32
    return %c0_i32, %c0_i32_0 : i32, i32
  }
  func.func @transform_4(%arg0: i32) -> (i32, i32) {
    %c0_i32 = arith.constant 0 : i32
    %c0_i32_0 = arith.constant 0 : i32
    %c0_i32_1 = arith.constant 0 : i32
    return %c0_i32, %c0_i32_0 : i32, i32
  }
  func.func @transform_5(%arg0: i32) -> (i32, i32) {
    %c0_i32 = arith.constant 0 : i32
    %c0_i32_0 = arith.constant 0 : i32
    %c0_i32_1 = arith.constant 0 : i32
    return %c0_i32, %c0_i32_0 : i32, i32
  }
  func.func @transform_6(%arg0: i32) -> (i32, i32) {
    %c0_i32 = arith.constant 0 : i32
    %c0_i32_0 = arith.constant 0 : i32
    %c0_i32_1 = arith.constant 0 : i32
    return %c0_i32, %c0_i32_0 : i32, i32
  }
  func.func @transform_7(%arg0: i32) -> (i32, i32) {
    %c0_i32 = arith.constant 0 : i32
    %c0_i32_0 = arith.constant 0 : i32
    %c0_i32_1 = arith.constant 0 : i32
    return %c0_i32, %c0_i32_0 : i32, i32
  }
  func.func @transform_8(%arg0: i32) -> (i32, i32, i32) {
    %c0_i32 = arith.constant 0 : i32
    %c0_i32_0 = arith.constant 0 : i32
    %c0_i32_1 = arith.constant 0 : i32
    return %arg0, %c0_i32, %c0_i32_0 : i32, i32, i32
  }
  func.func @transform_9(%arg0: i32) -> (i32, i32, i32, i32) {
    %c0_i32 = arith.constant 0 : i32
    %c0_i32_0 = arith.constant 0 : i32
    %c0_i32_1 = arith.constant 0 : i32
    %c0_i32_2 = arith.constant 0 : i32
    return %arg0, %c0_i32, %c0_i32_0, %c0_i32_1 : i32, i32, i32, i32
  }
}

</mosaic_0001>

<llo_original>
// kernel: tpu_custom_call.1
$region0: #{tpu_custom_call.1}
  #allocation0 [shape = 'u32[]', space=smem, size = 0x4, offset = 0x4, fixed_abs, tag = 'smem constant byte address 0x4 - core index']
  #allocation1 [shape = 'u32[72,128]{1,0:T(1,128)}', space=vmem, size = 0x9000, scoped, tag = 'internal scratch']
  %s0 = inlined_call_operand.vmem [shape: f32[2,32,64], index: 0, kind: input, shape index: {}]
  %s1 = inlined_call_operand.hbm [shape: f32[2,32,64], index: 1, kind: input, shape index: {}]
  %s2 = inlined_call_operand.vmem [shape: f32[16,32], index: 2, kind: input, shape index: {}]
  %s3 = inlined_call_operand.vmem [shape: f32[16,1], index: 3, kind: input, shape index: {}]
  %s4 = inlined_call_operand.vmem [shape: f32[32,32], index: 4, kind: input, shape index: {}]
  %s5 = inlined_call_operand.vmem [shape: f32[32,1], index: 5, kind: input, shape index: {}]
  %s6 = inlined_call_operand.vmem [shape: f32[32,16], index: 6, kind: input, shape index: {}]
  %s7 = inlined_call_operand.vmem [shape: f32[32,1], index: 7, kind: input, shape index: {}]
  %s8 = inlined_call_operand.hbm [shape: f32[2,32,64], index: 8, kind: output, shape index: {0}]
  %s9 = inlined_call_operand.hbm [shape: f32[2,4,64,64], index: 9, kind: output, shape index: {1}]
  %10 = xla_tuple %s8, %s9
  %s11 = sld [smem:[#allocation0]]
  $region77: #{tpu_custom_call.1} parent=0
    _
  %s13 = ssub.s32 1, %s11
  %s14 = scalar_select 0, %s13, %s11
  $region1: #{tpu_custom_call.1} parent=0
    #allocation2 [shape = 'u8[32768]{0}', space=vmem, size = 0x8000, scoped, tag = 'input window, operand 1']
    #allocation3 [shape = 's32[2]{0}', space=sflag, size = 0x8, scoped, tag = 'scoped memory for tpu_custom_call.1']
    #allocation4 [shape = 's32[2]{0}', space=sflag, size = 0x8, scoped, tag = 'scoped memory for tpu_custom_call.1']
    #allocation5 [shape = 'u8[32768]{0}', space=vmem, size = 0x8000, scoped, tag = 'output window, operand 0']
    #allocation6 [shape = 'u8[262144]{0}', space=vmem, size = 0x40000, scoped, tag = 'output window, operand 1']
    #allocation7 [shape = 's32[2]{0}', space=sflag, size = 0x8, scoped, tag = 'scoped memory for tpu_custom_call.1']
    %15 = vsyncpa [#allocation3], 0
    %s16 = scalar_lea.sflag [#allocation3], 1
    %17 = vsyncpa %s16, 0
    %18 = vsyncpa [#allocation4], 0
    %s19 = scalar_lea.sflag [#allocation4], 1
    %20 = vsyncpa %s19, 0
    %21 = vsyncpa [#allocation7], 0
    %s22 = scalar_lea.sflag [#allocation7], 1
    %23 = vsyncpa %s22, 0
    loop: start=0, step=1, limit=4
    $region2: #{tpu_custom_call.1} parent=1 // loop_pre_header
      _
    $region3: #{tpu_custom_call.1} parent=1 // loop_header
      %s25 = sphi 0, %s29
      %p26 = scmp.ge.s32.totalorder %s25, 4
      %s35 = sphi 0, %s37
      %s38 = sphi 0, %s35
      %s39 = sphi 0, %s38
      %s55 = sphi 0, %s39
      %s61 = sphi 0, %s63
      %s64 = sphi 0, %s61
      %s65 = sphi 0, %s64
      %s81 = sphi 0, %s65
      %s85 = sphi 0, %s85
      %s87 = sphi 0, %s85
      %s88 = sphi 0, %s87
      %s102 = sphi 0, %s88
      %s106 = sphi 0, %s106
      %s108 = sphi 0, %s106
      %s109 = sphi 0, %s108
      %s123 = sphi 0, %s109
      %s127 = sphi 0, %s127
      %s129 = sphi 0, %s127
      %s130 = sphi 0, %s129
      %s144 = sphi 0, %s130
      %s148 = sphi 0, %s148
      %s150 = sphi 0, %s148
      %s151 = sphi 0, %s150
      %s165 = sphi 0, %s151
      %s169 = sphi 0, %s169
      %s171 = sphi 0, %s169
      %s172 = sphi 0, %s171
      %s186 = sphi 0, %s172
      %s190 = sphi 0, %s190
      %s192 = sphi 0, %s190
      %s193 = sphi 0, %s192
      %s207 = sphi 0, %s193
      %s213 = sphi 0, %s215
      %s216 = sphi 0, %s213
      %s217 = sphi 0, %s216
      %s233 = sphi 0, %s217
      %s239 = sphi 0, %s241
      %s242 = sphi 0, %s239
      %s243 = sphi 0, %s242
      %s259 = sphi 0, %s243
    $region4: #{tpu_custom_call.1} parent=1 // loop_header_branch
      %28 = sbr.rel (%p26) target = $region8
    $region5: #{tpu_custom_call.1} parent=1 // loop_body
      %s30 = ssub.s32 %s25, 1
      %s31 = ssub.s32 %s25, 2
      %s32 = sadd.s32 %s25, 1
      %s33 = ssub.s32 %s25, %s32
      %p34 = scmp.eq.s32.totalorder %s33, 0
      %s36 = sadd.s32 %s35, 1
      %s37 = scalar_select %p34, %s35, %s36
      %p40 = pneg %p34
      %p41 = scmp.eq.s32.totalorder %s25, 1
      %p42 = por %p40, %p41
      %p43 = scmp.ne.s32.totalorder %s35, %s38
      %p44 = scmp.eq.s32.totalorder %s25, 0
      %p45 = por %p43, %p44
      %p46 = scmp.ne.s32.totalorder %s35, %s38
      %p47 = scmp.eq.s32.totalorder %s30, 1
      %p48 = por %p46, %p47
      %p49 = scmp.ne.s32.totalorder %s38, %s39
      %p50 = scmp.eq.s32.totalorder %s30, 0
      %p51 = por %p49, %p50
      %p52 = scmp.ne.s32.totalorder %s38, %s39
      %p53 = scmp.eq.s32.totalorder %s31, 1
      %p54 = por %p52, %p53
      %p56 = scmp.ne.s32.totalorder %s39, %s55
      %p57 = scmp.eq.s32.totalorder %s31, 0
      %p58 = por %p56, %p57
      %s59 = ssub.s32 %s25, %s32
      %p60 = scmp.eq.s32.totalorder %s59, 0
      %s62 = sadd.s32 %s61, 1
      %s63 = scalar_select %p60, %s61, %s62
      %p66 = pneg %p60
      %p67 = scmp.eq.s32.totalorder %s25, 1
      %p68 = por %p66, %p67
      %p69 = scmp.ne.s32.totalorder %s61, %s64
      %p70 = scmp.eq.s32.totalorder %s25, 0
      %p71 = por %p69, %p70
      %p72 = scmp.ne.s32.totalorder %s61, %s64
      %p73 = scmp.eq.s32.totalorder %s30, 1
      %p74 = por %p72, %p73
      %p75 = scmp.ne.s32.totalorder %s64, %s65
      %p76 = scmp.eq.s32.totalorder %s30, 0
      %p77 = por %p75, %p76
      %p78 = scmp.ne.s32.totalorder %s64, %s65
      %p79 = scmp.eq.s32.totalorder %s31, 1
      %p80 = por %p78, %p79
      %p82 = scmp.ne.s32.totalorder %s65, %s81
      %p83 = scmp.eq.s32.totalorder %s31, 0
      %p84 = por %p82, %p83
      %s86 = sadd.s32 %s85, 1
      %p89 = scmp.eq.s32.totalorder %s25, 1
      %p90 = scmp.ne.s32.totalorder %s85, %s87
      %p91 = scmp.eq.s32.totalorder %s25, 0
      %p92 = por %p90, %p91
      %p93 = scmp.ne.s32.totalorder %s85, %s87
      %p94 = scmp.eq.s32.totalorder %s30, 1
      %p95 = por %p93, %p94
      %p96 = scmp.ne.s32.totalorder %s87, %s88
      %p97 = scmp.eq.s32.totalorder %s30, 0
      %p98 = por %p96, %p97
      %p99 = scmp.ne.s32.totalorder %s87, %s88
      %p100 = scmp.eq.s32.totalorder %s31, 1
      %p101 = por %p99, %p100
      %p103 = scmp.ne.s32.totalorder %s88, %s102
      %p104 = scmp.eq.s32.totalorder %s31, 0
      %p105 = por %p103, %p104
      %s107 = sadd.s32 %s106, 1
      %p110 = scmp.eq.s32.totalorder %s25, 1
      %p111 = scmp.ne.s32.totalorder %s106, %s108
      %p112 = scmp.eq.s32.totalorder %s25, 0
      %p113 = por %p111, %p112
      %p114 = scmp.ne.s32.totalorder %s106, %s108
      %p115 = scmp.eq.s32.totalorder %s30, 1
      %p116 = por %p114, %p115
      %p117 = scmp.ne.s32.totalorder %s108, %s109
      %p118 = scmp.eq.s32.totalorder %s30, 0
      %p119 = por %p117, %p118
      %p120 = scmp.ne.s32.totalorder %s108, %s109
      %p121 = scmp.eq.s32.totalorder %s31, 1
      %p122 = por %p120, %p121
      %p124 = scmp.ne.s32.totalorder %s109, %s123
      %p125 = scmp.eq.s32.totalorder %s31, 0
      %p126 = por %p124, %p125
      %s128 = sadd.s32 %s127, 1
      %p131 = scmp.eq.s32.totalorder %s25, 1
      %p132 = scmp.ne.s32.totalorder %s127, %s129
      %p133 = scmp.eq.s32.totalorder %s25, 0
      %p134 = por %p132, %p133
      %p135 = scmp.ne.s32.totalorder %s127, %s129
      %p136 = scmp.eq.s32.totalorder %s30, 1
      %p137 = por %p135, %p136
      %p138 = scmp.ne.s32.totalorder %s129, %s130
      %p139 = scmp.eq.s32.totalorder %s30, 0
      %p140 = por %p138, %p139
      %p141 = scmp.ne.s32.totalorder %s129, %s130
      %p142 = scmp.eq.s32.totalorder %s31, 1
      %p143 = por %p141, %p142
      %p145 = scmp.ne.s32.totalorder %s130, %s144
      %p146 = scmp.eq.s32.totalorder %s31, 0
      %p147 = por %p145, %p146
      %s149 = sadd.s32 %s148, 1
      %p152 = scmp.eq.s32.totalorder %s25, 1
      %p153 = scmp.ne.s32.totalorder %s148, %s150
      %p154 = scmp.eq.s32.totalorder %s25, 0
      %p155 = por %p153, %p154
      %p156 = scmp.ne.s32.totalorder %s148, %s150
      %p157 = scmp.eq.s32.totalorder %s30, 1
      %p158 = por %p156, %p157
      %p159 = scmp.ne.s32.totalorder %s150, %s151
      %p160 = scmp.eq.s32.totalorder %s30, 0
      %p161 = por %p159, %p160
      %p162 = scmp.ne.s32.totalorder %s150, %s151
      %p163 = scmp.eq.s32.totalorder %s31, 1
      %p164 = por %p162, %p163
      %p166 = scmp.ne.s32.totalorder %s151, %s165
      %p167 = scmp.eq.s32.totalorder %s31, 0
      %p168 = por %p166, %p167
      %s170 = sadd.s32 %s169, 1
      %p173 = scmp.eq.s32.totalorder %s25, 1
      %p174 = scmp.ne.s32.totalorder %s169, %s171
      %p175 = scmp.eq.s32.totalorder %s25, 0
      %p176 = por %p174, %p175
      %p177 = scmp.ne.s32.totalorder %s169, %s171
      %p178 = scmp.eq.s32.totalorder %s30, 1
      %p179 = por %p177, %p178
      %p180 = scmp.ne.s32.totalorder %s171, %s172
      %p181 = scmp.eq.s32.totalorder %s30, 0
      %p182 = por %p180, %p181
      %p183 = scmp.ne.s32.totalorder %s171, %s172
      %p184 = scmp.eq.s32.totalorder %s31, 1
      %p185 = por %p183, %p184
      %p187 = scmp.ne.s32.totalorder %s172, %s186
      %p188 = scmp.eq.s32.totalorder %s31, 0
      %p189 = por %p187, %p188
      %s191 = sadd.s32 %s190, 1
      %p194 = scmp.eq.s32.totalorder %s25, 1
      %p195 = scmp.ne.s32.totalorder %s190, %s192
      %p196 = scmp.eq.s32.totalorder %s25, 0
      %p197 = por %p195, %p196
      %p198 = scmp.ne.s32.totalorder %s190, %s192
      %p199 = scmp.eq.s32.totalorder %s30, 1
      %p200 = por %p198, %p199
      %p201 = scmp.ne.s32.totalorder %s192, %s193
      %p202 = scmp.eq.s32.totalorder %s30, 0
      %p203 = por %p201, %p202
      %p204 = scmp.ne.s32.totalorder %s192, %s193
      %p205 = scmp.eq.s32.totalorder %s31, 1
      %p206 = por %p204, %p205
      %p208 = scmp.ne.s32.totalorder %s193, %s207
      %p209 = scmp.eq.s32.totalorder %s31, 0
      %p210 = por %p208, %p209
      %s211 = ssub.s32 %s25, %s32
      %p212 = scmp.eq.s32.totalorder %s211, 0
      %s214 = sadd.s32 %s213, 1
      %s215 = scalar_select %p212, %s213, %s214
      %p218 = pneg %p212
      %p219 = scmp.eq.s32.totalorder %s25, 1
      %p220 = por %p218, %p219
      %p221 = scmp.ne.s32.totalorder %s213, %s216
      %p222 = scmp.eq.s32.totalorder %s25, 0
      %p223 = por %p221, %p222
      %p224 = scmp.ne.s32.totalorder %s213, %s216
      %p225 = scmp.eq.s32.totalorder %s30, 1
      %p226 = por %p224, %p225
      %p227 = scmp.ne.s32.totalorder %s216, %s217
      %p228 = scmp.eq.s32.totalorder %s30, 0
      %p229 = por %p227, %p228
      %p230 = scmp.ne.s32.totalorder %s216, %s217
      %p231 = scmp.eq.s32.totalorder %s31, 1
      %p232 = por %p230, %p231
      %p234 = scmp.ne.s32.totalorder %s217, %s233
      %p235 = scmp.eq.s32.totalorder %s31, 0
      %p236 = por %p234, %p235
      %s237 = ssub.s32 %s25, %s32
      %p238 = scmp.eq.s32.totalorder %s237, 0
      %s240 = sadd.s32 %s239, 1
      %s241 = scalar_select %p238, %s239, %s240
      %p244 = pneg %p238
      %p245 = scmp.eq.s32.totalorder %s25, 1
      %p246 = por %p244, %p245
      %p247 = scmp.ne.s32.totalorder %s239, %s242
      %p248 = scmp.eq.s32.totalorder %s25, 0
      %p249 = por %p247, %p248
      %p250 = scmp.ne.s32.totalorder %s239, %s242
      %p251 = scmp.eq.s32.totalorder %s30, 1
      %p252 = por %p250, %p251
      %p253 = scmp.ne.s32.totalorder %s242, %s243
      %p254 = scmp.eq.s32.totalorder %s30, 0
      %p255 = por %p253, %p254
      %p256 = scmp.ne.s32.totalorder %s242, %s243
      %p257 = scmp.eq.s32.totalorder %s31, 1
      %p258 = por %p256, %p257
      %p260 = scmp.ne.s32.totalorder %s243, %s259
      %p261 = scmp.eq.s32.totalorder %s31, 0
      %p262 = por %p260, %p261
      %p263 = scmp.le.s32.totalorder 1, %s25
      %p264 = scmp.lt.s32.totalorder %s25, 3
      %p265 = pnand %p263, %p264
      %p266 = pneg %p265
      // Predicated region
      $region9: #{tpu_custom_call.1} parent=5 // pred_check
        _
      $region10: #{tpu_custom_call.1} parent=5 // pred_check_branch
        %268 = sbr.rel (%p265) target = $region12
      $region11: #{tpu_custom_call.1} parent=5 // pred_region
        %s269 = ssub.s32 %s25, 1
        // Predicated region
        $region13: #{tpu_custom_call.1} parent=11 // pred_check
          %p270 = pneg %p98
        $region14: #{tpu_custom_call.1} parent=11 // pred_check_branch
          %272 = sbr.rel (%p270) target = $region16
        $region15: #{tpu_custom_call.1} parent=11 // pred_region
          _
        $region16: #{tpu_custom_call.1} parent=11 // pred_fallthru
          _
        // Predicated region
        $region17: #{tpu_custom_call.1} parent=11 // pred_check
          %p273 = pneg %p119
        $region18: #{tpu_custom_call.1} parent=11 // pred_check_branch
          %275 = sbr.rel (%p273) target = $region20
        $region19: #{tpu_custom_call.1} parent=11 // pred_region
          _
        $region20: #{tpu_custom_call.1} parent=11 // pred_fallthru
          _
        // Predicated region
        $region21: #{tpu_custom_call.1} parent=11 // pred_check
          %p276 = pneg %p140
        $region22: #{tpu_custom_call.1} parent=11 // pred_check_branch
          %278 = sbr.rel (%p276) target = $region24
        $region23: #{tpu_custom_call.1} parent=11 // pred_region
          _
        $region24: #{tpu_custom_call.1} parent=11 // pred_fallthru
          _
        // Predicated region
        $region25: #{tpu_custom_call.1} parent=11 // pred_check
          %p279 = pneg %p161
        $region26: #{tpu_custom_call.1} parent=11 // pred_check_branch
          %281 = sbr.rel (%p279) target = $region28
        $region27: #{tpu_custom_call.1} parent=11 // pred_region
          _
        $region28: #{tpu_custom_call.1} parent=11 // pred_fallthru
          _
        // Predicated region
        $region29: #{tpu_custom_call.1} parent=11 // pred_check
          %p282 = pneg %p182
        $region30: #{tpu_custom_call.1} parent=11 // pred_check_branch
          %284 = sbr.rel (%p282) target = $region32
        $region31: #{tpu_custom_call.1} parent=11 // pred_region
          _
        $region32: #{tpu_custom_call.1} parent=11 // pred_fallthru
          _
        // Predicated region
        $region33: #{tpu_custom_call.1} parent=11 // pred_check
          %p285 = pneg %p203
        $region34: #{tpu_custom_call.1} parent=11 // pred_check_branch
          %287 = sbr.rel (%p285) target = $region36
        $region35: #{tpu_custom_call.1} parent=11 // pred_region
          _
        $region36: #{tpu_custom_call.1} parent=11 // pred_fallthru
          _
      $region12: #{tpu_custom_call.1} parent=5 // pred_fallthru
        _
      %p288 = scmp.lt.s32.totalorder %s25, 2
      // Predicated region
      $region37: #{tpu_custom_call.1} parent=5 // pred_check
        %p289 = pneg %p288
      $region38: #{tpu_custom_call.1} parent=5 // pred_check_branch
        %291 = sbr.rel (%p289) target = $region40
      $region39: #{tpu_custom_call.1} parent=5 // pred_region
        // Predicated region
        $region41: #{tpu_custom_call.1} parent=39 // pred_check
          %p292 = pneg %p45
        $region42: #{tpu_custom_call.1} parent=39 // pred_check_branch
          %294 = sbr.rel (%p292) target = $region44
        $region43: #{tpu_custom_call.1} parent=39 // pred_region
          %p295 = scmp.lt.s32.totalorder %s25, 1
          %s296 = scalar_select %p295, %s25, 1
          %s297 = smul.addr %s296, 4
          %s298 = smul.addr %s297, 8
          %s299 = scalar_lea.vmem %s0, %s298
        $region44: #{tpu_custom_call.1} parent=39 // pred_fallthru
          _
        // Predicated region
        $region45: #{tpu_custom_call.1} parent=39 // pred_check
          %p300 = pneg %p71
        $region46: #{tpu_custom_call.1} parent=39 // pred_check_branch
          %302 = sbr.rel (%p300) target = $region48
        $region47: #{tpu_custom_call.1} parent=39 // pred_region
          %s303 = sand.u32 %s61, 1
          %s304 = scalar_lea.sflag [#allocation3], %s303
          %s305 = sand.u32 %s61, 1
          %s306 = smul.addr %s305, 32
          %s307 = scalar_lea.vmem [#allocation2], %s306
          %309 = vsyncadd %s304, 0
          %s310 = smul.addr %s25, 4
          %s311 = smul.addr %s310, 8
          %s312 = scalar_lea.hbm %s1, %s311
          %s313 = sshll.u32 %s312, 4
          %s314 = int_to_ptr.hbm [resolvable:$true] %s313
          %s315 = sshll.u32 %s307, 4
          %s316 = int_to_ptr.vmem [resolvable:$true] %s315
          %321 = dma.hbm_to_vmem [thread:$0]  %s314, 512, %s316, %s304, 128, 128, 8
        $region48: #{tpu_custom_call.1} parent=39 // pred_fallthru
          _
      $region40: #{tpu_custom_call.1} parent=5 // pred_fallthru
        _
      %p322 = scmp.le.s32.totalorder 1, %s25
      %p323 = scmp.lt.s32.totalorder %s25, 3
      %p324 = pnand %p322, %p323
      %p325 = pneg %p324
      // Predicated region
      $region49: #{tpu_custom_call.1} parent=5 // pred_check
        _
      $region50: #{tpu_custom_call.1} parent=5 // pred_check_branch
        %327 = sbr.rel (%p324) target = $region52
      $region51: #{tpu_custom_call.1} parent=5 // pred_region
        %s328 = ssub.s32 %s25, 1
        %s329 = sand.u32 %s64, 1
        %s330 = scalar_lea.sflag [#allocation3], %s329
        %s331 = sand.u32 %s64, 1
        %s332 = smul.addr %s331, 32
        %s333 = scalar_lea.vmem [#allocation2], %s332
        // Predicated region
        $region53: #{tpu_custom_call.1} parent=51 // pred_check
          %p334 = pneg %p77
        $region54: #{tpu_custom_call.1} parent=51 // pred_check_branch
          %336 = sbr.rel (%p334) target = $region56
        $region55: #{tpu_custom_call.1} parent=51 // pred_region
          %338 = dma.done %s330, 512
        $region56: #{tpu_custom_call.1} parent=51 // pred_fallthru
          _
        %p339 = scmp.lt.s32.totalorder %s30, 1
        %s340 = scalar_select %p339, %s30, 1
        %s341 = smul.addr %s340, 4
        %s342 = smul.addr %s341, 8
        %s343 = scalar_lea.vmem %s0, %s342
        %p344 = pneg %p51
        %p345 = pneg %p48
        %s346 = sand.u32 %s64, 1
        %s347 = scalar_lea.sflag [#allocation3], %s346
        %s348 = sand.u32 %s64, 1
        %s349 = smul.addr %s348, 32
        %s350 = scalar_lea.vmem [#allocation2], %s349
        %p351 = pneg %p77
        %p352 = pneg %p74
        %p353 = pneg %p98
        %p354 = pneg %p95
        %p355 = pneg %p119
        %p356 = pneg %p116
        %p357 = pneg %p140
        %p358 = pneg %p137
        %p359 = pneg %p161
        %p360 = pneg %p158
        %p361 = pneg %p182
        %p362 = pneg %p179
        %p363 = pneg %p203
        %p364 = pneg %p200
        %p365 = pneg %p229
        %p366 = pneg %p226
        %s367 = sand.u32 %s216, 1
        %s368 = scalar_lea.sflag [#allocation4], %s367
        %s369 = sand.u32 %s216, 1
        %s370 = smul.addr %s369, 32
        %s371 = scalar_lea.vmem [#allocation5], %s370
        %p372 = pneg %p255
        %p373 = pneg %p252
        %s374 = sand.u32 %s242, 1
        %s375 = scalar_lea.sflag [#allocation7], %s374
        %s376 = sand.u32 %s242, 1
        %s377 = smul.addr %s376, 256
        %s378 = scalar_lea.vmem [#allocation6], %s377
        %p379 = scmp.lt.s32.totalorder %s30, 1
        %s380 = scalar_select %p379, %s30, 1
        %s381 = smul.addr %s380, 4
        %s382 = smul.addr %s381, 8
        %s383 = scalar_lea.vmem %s0, %s382
        %v384 = vld [vmem:[%s383] sm:$0xff]
        %v385 = vld [vmem:[%s383 + $0x8] sm:$0xff]
        %v386 = vld [vmem:[%s383 + $0x10] sm:$0xff]
        %v387 = vld [vmem:[%s383 + $0x18] sm:$0xff]
        %v388 = vld [vmem:[%s333] sm:$0xff]
        %v389 = vld [vmem:[%s333 + $0x8] sm:$0xff]
        %v390 = vld [vmem:[%s333 + $0x10] sm:$0xff]
        %v391 = vld [vmem:[%s333 + $0x18] sm:$0xff]
        %v392 = vld [vmem:[%s2] sm:$0xff]
        %v393 = vld [vmem:[%s2 + $0x8] sm:$0xff]
        %v394 = vld [vmem:[%s3] sm:$0xff]
        %v395 = vld [vmem:[%s3 + $0x8] sm:$0xff]
        %397 = vset.pattern.permute.xlu0 0
        %398 = vperm.xlu0 %397, %v394
        %v399 = vpop.permute.xlu0 %398
        %402 = vset.pattern.permute.xlu0 0
        %403 = vperm.xlu0 %402, %v395
        %v404 = vpop.permute.xlu0 %403
        %vm406 = vcmask 261120
        %v408 = vsel %vm406, %v392, 0
        %v411 = vsel %vm406, %v393, 0
        %413 = vmatpush.msra.mxu0 0.0
        %414 = vmatpush.msra.mxu0 0.0
        %415 = vmatpush.msra.mxu0 0.0
        %416 = vmatpush.msra.mxu0 0.0
        %417 = vmatpush.msra.mxu0 0.0
        %418 = vmatpush.msra.mxu0 0.0
        %419 = vmatpush.msra.mxu0 0.0
        %420 = vmatpush.msra.mxu0 0.0
        %421 = vmatpush.msra.mxu0 0.0
        %422 = vmatpush.msra.mxu0 0.0
        %423 = vmatpush.msra.mxu0 0.0
        %424 = vmatpush.msra.mxu0 0.0
        %425 = vmatpush.msra.mxu0 %v391
        %426 = vmatpush.msra.mxu0 %v390
        %427 = vmatpush.msra.mxu0 %v389
        %428 = vmatpush.msra.mxu0 %v388
        %429 = vmatmul.f32.gmra.mxu0 %v408
        %v430 = vpop.f32.mrf.mxu0
        %v431 = vadd.f32 %v399, %v430
        %432 = vmatmul.f32.gmra.mxu0 %v411
        %v433 = vpop.f32.mrf.mxu0
        %v434 = vadd.f32 %v404, %v433
        %435 = vdwg.mxu0
        %v436 = vld [vmem:[%s4] sm:$0xff]
        %v437 = vld [vmem:[%s4 + $0x8] sm:$0xff]
        %v438 = vld [vmem:[%s4 + $0x10] sm:$0xff]
        %v439 = vld [vmem:[%s4 + $0x18] sm:$0xff]
        %v440 = vld [vmem:[%s5] sm:$0xff]
        %v441 = vld [vmem:[%s5 + $0x8] sm:$0xff]
        %v442 = vld [vmem:[%s5 + $0x10] sm:$0xff]
        %v443 = vld [vmem:[%s5 + $0x18] sm:$0xff]
        %445 = vset.pattern.permute.xlu0 0
        %446 = vperm.xlu0 %445, %v440
        %v447 = vpop.permute.xlu0 %446
        %450 = vset.pattern.permute.xlu0 0
        %451 = vperm.xlu0 %450, %v441
        %v452 = vpop.permute.xlu0 %451
        %455 = vset.pattern.permute.xlu0 0
        %456 = vperm.xlu0 %455, %v442
        %v457 = vpop.permute.xlu0 %456
        %460 = vset.pattern.permute.xlu0 0
        %461 = vperm.xlu0 %460, %v443
        %v462 = vpop.permute.xlu0 %461
        %v465 = vsel %vm406, %v436, 0
        %v468 = vsel %vm406, %v437, 0
        %v471 = vsel %vm406, %v438, 0
        %v474 = vsel %vm406, %v439, 0
        %476 = vmatpush.msra.mxu0 0.0
        %477 = vmatpush.msra.mxu0 0.0
        %478 = vmatpush.msra.mxu0 0.0
        %479 = vmatpush.msra.mxu0 0.0
        %480 = vmatpush.msra.mxu0 0.0
        %481 = vmatpush.msra.mxu0 0.0
        %482 = vmatpush.msra.mxu0 0.0
        %483 = vmatpush.msra.mxu0 0.0
        %484 = vmatpush.msra.mxu0 0.0
        %485 = vmatpush.msra.mxu0 0.0
        %486 = vmatpush.msra.mxu0 0.0
        %487 = vmatpush.msra.mxu0 0.0
        %488 = vmatpush.msra.mxu0 %v387
        %489 = vmatpush.msra.mxu0 %v386
        %490 = vmatpush.msra.mxu0 %v385
        %491 = vmatpush.msra.mxu0 %v384
        %492 = vmatmul.f32.gmra.mxu0 %v465
        %v493 = vpop.f32.mrf.mxu0
        %v494 = vadd.f32 %v447, %v493
        %495 = vmatmul.f32.gmra.mxu0 %v468
        %v496 = vpop.f32.mrf.mxu0
        %v497 = vadd.f32 %v452, %v496
        %498 = vmatmul.f32.gmra.mxu0 %v471
        %v499 = vpop.f32.mrf.mxu0
        %v500 = vadd.f32 %v457, %v499
        %501 = vmatmul.f32.gmra.mxu0 %v474
        %v502 = vpop.f32.mrf.mxu0
        %v503 = vadd.f32 %v462, %v502
        %504 = vdwg.mxu0
        %505 = vxpose.xlu0.b32.start [1/16] %v431, 128
        %506 = vxpose.xlu0.b32.cont [2/16] %v434, 128
        %507 = vxpose.xlu0.b32.cont [3/16] 0.0, 128
        %508 = vxpose.xlu0.b32.cont [4/16] 0.0, 128
        %509 = vxpose.xlu0.b32.cont [5/16] 0.0, 128
        %510 = vxpose.xlu0.b32.cont [6/16] 0.0, 128
        %511 = vxpose.xlu0.b32.cont [7/16] 0.0, 128
        %512 = vxpose.xlu0.b32.cont [8/16] 0.0, 128
        %513 = vxpose.xlu0.b32.cont [9/16] 0.0, 128
        %514 = vxpose.xlu0.b32.cont [10/16] 0.0, 128
        %515 = vxpose.xlu0.b32.cont [11/16] 0.0, 128
        %516 = vxpose.xlu0.b32.cont [12/16] 0.0, 128
        %517 = vxpose.xlu0.b32.cont [13/16] 0.0, 128
        %518 = vxpose.xlu0.b32.cont [14/16] 0.0, 128
        %519 = vxpose.xlu0.b32.cont [15/16] 0.0, 128
        %520 = vxpose.xlu0.b32.end [16/16] 0.0, 128
        %v521 = vpop.trf.xlu0
        %v522 = vpop.trf.xlu0
        %v523 = vpop.trf.xlu0
        %v524 = vpop.trf.xlu0
        %v525 = vpop.trf.xlu0
        %v526 = vpop.trf.xlu0
        %v527 = vpop.trf.xlu0
        %v528 = vpop.trf.xlu0
        %v529 = vpop.trf.xlu0
        %v530 = vpop.trf.xlu0
        %v531 = vpop.trf.xlu0
        %v532 = vpop.trf.xlu0
        %v533 = vpop.trf.xlu0
        %v534 = vpop.trf.xlu0
        %v535 = vpop.trf.xlu0
        %v536 = vpop.trf.xlu0
        %vm537 = vcmask 31744
        %v539 = vsel %vm537, %v521, 0
        %v542 = vsel %vm537, %v522, 0
        %v545 = vsel %vm537, %v523, 0
        %v548 = vsel %vm537, %v524, 0
        %v551 = vsel %vm537, %v525, 0
        %v554 = vsel %vm537, %v526, 0
        %v557 = vsel %vm537, %v527, 0
        %v560 = vsel %vm537, %v528, 0
        %vm562 = vcmask 1043456
        %v564 = vsel %vm562, %v494, 0
        %566 = vmatpush.msra.mxu0 0.0
        %567 = vmatpush.msra.mxu0 0.0
        %568 = vmatpush.msra.mxu0 0.0
        %569 = vmatpush.msra.mxu0 0.0
        %570 = vmatpush.msra.mxu0 0.0
        %571 = vmatpush.msra.mxu0 0.0
        %572 = vmatpush.msra.mxu0 0.0
        %573 = vmatpush.msra.mxu0 0.0
        %574 = vmatpush.msra.mxu0 0.0
        %575 = vmatpush.msra.mxu0 0.0
        %576 = vmatpush.msra.mxu0 0.0
        %577 = vmatpush.msra.mxu0 0.0
        %578 = vmatpush.msra.mxu0 0.0
        %579 = vmatpush.msra.mxu0 0.0
        %580 = vmatpush.msra.mxu0 0.0
        %581 = vmatpush.msra.mxu0 %v564
        %582 = vmatmul.f32.gmra.mxu0 %v539
        %v583 = vpop.f32.mrf.mxu0
        %v584 = vadd.f32 0.0, %v583
        %585 = vmatmul.f32.gmra.mxu0 %v542
        %v586 = vpop.f32.mrf.mxu0
        %v587 = vadd.f32 0.0, %v586
        %588 = vmatmul.f32.gmra.mxu0 %v545
        %v589 = vpop.f32.mrf.mxu0
        %v590 = vadd.f32 0.0, %v589
        %591 = vmatmul.f32.gmra.mxu0 %v548
        %v592 = vpop.f32.mrf.mxu0
        %v593 = vadd.f32 0.0, %v592
        %594 = vmatmul.f32.gmra.mxu0 %v551
        %v595 = vpop.f32.mrf.mxu0
        %v596 = vadd.f32 0.0, %v595
        %597 = vmatmul.f32.gmra.mxu0 %v554
        %v598 = vpop.f32.mrf.mxu0
        %v599 = vadd.f32 0.0, %v598
        %600 = vmatmul.f32.gmra.mxu0 %v557
        %v601 = vpop.f32.mrf.mxu0
        %v602 = vadd.f32 0.0, %v601
        %603 = vmatmul.f32.gmra.mxu0 %v560
        %v604 = vpop.f32.mrf.mxu0
        %v605 = vadd.f32 0.0, %v604
        %606 = vdwg.mxu0
        %v607 = vmul.f32 %v584, 0.5
        %v608 = vmul.f32 %v587, 0.5
        %v609 = vmul.f32 %v590, 0.5
        %v610 = vmul.f32 %v593, 0.5
        %v611 = vmul.f32 %v596, 0.5
        %v612 = vmul.f32 %v599, 0.5
        %v613 = vmul.f32 %v602, 0.5
        %v614 = vmul.f32 %v605, 0.5
        %vm615 = vcmask 523264
        %v616 = vsel %vm615, %v607, -inf
        %617 = vmax.xlane.f32.xlu0 %v616
        %v618 = vpop.xlane.xlu0 %617
        %v619 = vsel %vm615, %v608, -inf
        %620 = vmax.xlane.f32.xlu0 %v619
        %v621 = vpop.xlane.xlu0 %620
        %v622 = vsel %vm615, %v609, -inf
        %623 = vmax.xlane.f32.xlu0 %v622
        %v624 = vpop.xlane.xlu0 %623
        %v625 = vsel %vm615, %v610, -inf
        %626 = vmax.xlane.f32.xlu0 %v625
        %v627 = vpop.xlane.xlu0 %626
        %v628 = vsel %vm615, %v611, -inf
        %629 = vmax.xlane.f32.xlu0 %v628
        %v630 = vpop.xlane.xlu0 %629
        %v631 = vsel %vm615, %v612, -inf
        %632 = vmax.xlane.f32.xlu0 %v631
        %v633 = vpop.xlane.xlu0 %632
        %v634 = vsel %vm615, %v613, -inf
        %635 = vmax.xlane.f32.xlu0 %v634
        %v636 = vpop.xlane.xlu0 %635
        %v637 = vsel %vm615, %v614, -inf
        %638 = vmax.xlane.f32.xlu0 %v637
        %v639 = vpop.xlane.xlu0 %638
        %v640 = vsub.f32 %v607, %v618
        %v641 = vsub.f32 %v608, %v621
        %v642 = vsub.f32 %v609, %v624
        %v643 = vsub.f32 %v610, %v627
        %v644 = vsub.f32 %v611, %v630
        %v645 = vsub.f32 %v612, %v633
        %v646 = vsub.f32 %v613, %v636
        %v647 = vsub.f32 %v614, %v639
        %v648 = vmul.f32 %v640, 1.442695
        %v649 = vpow.pop %v648
        %v650 = vmul.f32 %v641, 1.442695
        %v651 = vpow.pop %v650
        %v652 = vmul.f32 %v642, 1.442695
        %v653 = vpow.pop %v652
        %v654 = vmul.f32 %v643, 1.442695
        %v655 = vpow.pop %v654
        %v656 = vmul.f32 %v644, 1.442695
        %v657 = vpow.pop %v656
        %v658 = vmul.f32 %v645, 1.442695
        %v659 = vpow.pop %v658
        %v660 = vmul.f32 %v646, 1.442695
        %v661 = vpow.pop %v660
        %v662 = vmul.f32 %v647, 1.442695
        %v663 = vpow.pop %v662
        %v664 = vsel %vm615, %v649, 0.0
        %665 = vadd.xlane.f32.xlu0 %v664
        %v666 = vpop.xlane.xlu0 %665
        %v667 = vsel %vm615, %v651, 0.0
        %668 = vadd.xlane.f32.xlu0 %v667
        %v669 = vpop.xlane.xlu0 %668
        %v670 = vsel %vm615, %v653, 0.0
        %671 = vadd.xlane.f32.xlu0 %v670
        %v672 = vpop.xlane.xlu0 %671
        %v673 = vsel %vm615, %v655, 0.0
        %674 = vadd.xlane.f32.xlu0 %v673
        %v675 = vpop.xlane.xlu0 %674
        %v676 = vsel %vm615, %v657, 0.0
        %677 = vadd.xlane.f32.xlu0 %v676
        %v678 = vpop.xlane.xlu0 %677
        %v679 = vsel %vm615, %v659, 0.0
        %680 = vadd.xlane.f32.xlu0 %v679
        %v681 = vpop.xlane.xlu0 %680
        %v682 = vsel %vm615, %v661, 0.0
        %683 = vadd.xlane.f32.xlu0 %v682
        %v684 = vpop.xlane.xlu0 %683
        %v685 = vsel %vm615, %v663, 0.0
        %686 = vadd.xlane.f32.xlu0 %v685
        %v687 = vpop.xlane.xlu0 %686
        %v688 = vrcp.pop %v666
        %v689 = vmul.f32 %v666, %v688
        %v690 = vsub.f32 1.0, %v689
        %v691 = vmul.f32 %v688, %v690
        %v692 = vadd.f32 %v688, %v691
        %vm693 = vweird.f32 %v666
        %vm694 = vweird.f32 %v688
        %vm695 = vmor %vm693, %vm694
        %v696 = vsel %vm695, %v688, %v692
        %v697 = vand.u32 2147483647, %v666
        %vm698 = vcmp.eq.f32.partialorder %v697, 8.507059e+37
        %v699 = vand.u32 %v666, 2147483648
        %v700 = vor.u32 1.1754944e-38, %v699
        %v701 = vsel %vm698, %v700, %v696
        %v702 = vrcp.pop %v669
        %v703 = vmul.f32 %v669, %v702
        %v704 = vsub.f32 1.0, %v703
        %v705 = vmul.f32 %v702, %v704
        %v706 = vadd.f32 %v702, %v705
        %vm707 = vweird.f32 %v669
        %vm708 = vweird.f32 %v702
        %vm709 = vmor %vm707, %vm708
        %v710 = vsel %vm709, %v702, %v706
        %v711 = vand.u32 2147483647, %v669
        %vm712 = vcmp.eq.f32.partialorder %v711, 8.507059e+37
        %v713 = vand.u32 %v669, 2147483648
        %v714 = vor.u32 1.1754944e-38, %v713
        %v715 = vsel %vm712, %v714, %v710
        %v716 = vrcp.pop %v672
        %v717 = vmul.f32 %v672, %v716
        %v718 = vsub.f32 1.0, %v717
        %v719 = vmul.f32 %v716, %v718
        %v720 = vadd.f32 %v716, %v719
        %vm721 = vweird.f32 %v672
        %vm722 = vweird.f32 %v716
        %vm723 = vmor %vm721, %vm722
        %v724 = vsel %vm723, %v716, %v720
        %v725 = vand.u32 2147483647, %v672
        %vm726 = vcmp.eq.f32.partialorder %v725, 8.507059e+37
        %v727 = vand.u32 %v672, 2147483648
        %v728 = vor.u32 1.1754944e-38, %v727
        %v729 = vsel %vm726, %v728, %v724
        %v730 = vrcp.pop %v675
        %v731 = vmul.f32 %v675, %v730
        %v732 = vsub.f32 1.0, %v731
        %v733 = vmul.f32 %v730, %v732
        %v734 = vadd.f32 %v730, %v733
        %vm735 = vweird.f32 %v675
        %vm736 = vweird.f32 %v730
        %vm737 = vmor %vm735, %vm736
        %v738 = vsel %vm737, %v730, %v734
        %v739 = vand.u32 2147483647, %v675
        %vm740 = vcmp.eq.f32.partialorder %v739, 8.507059e+37
        %v741 = vand.u32 %v675, 2147483648
        %v742 = vor.u32 1.1754944e-38, %v741
        %v743 = vsel %vm740, %v742, %v738
        %v744 = vrcp.pop %v678
        %v745 = vmul.f32 %v678, %v744
        %v746 = vsub.f32 1.0, %v745
        %v747 = vmul.f32 %v744, %v746
        %v748 = vadd.f32 %v744, %v747
        %vm749 = vweird.f32 %v678
        %vm750 = vweird.f32 %v744
        %vm751 = vmor %vm749, %vm750
        %v752 = vsel %vm751, %v744, %v748
        %v753 = vand.u32 2147483647, %v678
        %vm754 = vcmp.eq.f32.partialorder %v753, 8.507059e+37
        %v755 = vand.u32 %v678, 2147483648
        %v756 = vor.u32 1.1754944e-38, %v755
        %v757 = vsel %vm754, %v756, %v752
        %v758 = vrcp.pop %v681
        %v759 = vmul.f32 %v681, %v758
        %v760 = vsub.f32 1.0, %v759
        %v761 = vmul.f32 %v758, %v760
        %v762 = vadd.f32 %v758, %v761
        %vm763 = vweird.f32 %v681
        %vm764 = vweird.f32 %v758
        %vm765 = vmor %vm763, %vm764
        %v766 = vsel %vm765, %v758, %v762
        %v767 = vand.u32 2147483647, %v681
        %vm768 = vcmp.eq.f32.partialorder %v767, 8.507059e+37
        %v769 = vand.u32 %v681, 2147483648
        %v770 = vor.u32 1.1754944e-38, %v769
        %v771 = vsel %vm768, %v770, %v766
        %v772 = vrcp.pop %v684
        %v773 = vmul.f32 %v684, %v772
        %v774 = vsub.f32 1.0, %v773
        %v775 = vmul.f32 %v772, %v774
        %v776 = vadd.f32 %v772, %v775
        %vm777 = vweird.f32 %v684
        %vm778 = vweird.f32 %v772
        %vm779 = vmor %vm777, %vm778
        %v780 = vsel %vm779, %v772, %v776
        %v781 = vand.u32 2147483647, %v684
        %vm782 = vcmp.eq.f32.partialorder %v781, 8.507059e+37
        %v783 = vand.u32 %v684, 2147483648
        %v784 = vor.u32 1.1754944e-38, %v783
        %v785 = vsel %vm782, %v784, %v780
        %v786 = vrcp.pop %v687
        %v787 = vmul.f32 %v687, %v786
        %v788 = vsub.f32 1.0, %v787
        %v789 = vmul.f32 %v786, %v788
        %v790 = vadd.f32 %v786, %v789
        %vm791 = vweird.f32 %v687
        %vm792 = vweird.f32 %v786
        %vm793 = vmor %vm791, %vm792
        %v794 = vsel %vm793, %v786, %v790
        %v795 = vand.u32 2147483647, %v687
        %vm796 = vcmp.eq.f32.partialorder %v795, 8.507059e+37
        %v797 = vand.u32 %v687, 2147483648
        %v798 = vor.u32 1.1754944e-38, %v797
        %v799 = vsel %vm796, %v798, %v794
        %v800 = vmul.f32 %v649, %v701
        %v801 = vmul.f32 %v651, %v715
        %v802 = vmul.f32 %v653, %v729
        %v803 = vmul.f32 %v655, %v743
        %v804 = vmul.f32 %v657, %v757
        %v805 = vmul.f32 %v659, %v771
        %v806 = vmul.f32 %v661, %v785
        %v807 = vmul.f32 %v663, %v799
        %808 = vst.msk [vmem:[%s378] sm:$0xff] %vm615, %v800
        %809 = vst.msk [vmem:[%s378 + $0x8] sm:$0xff] %vm615, %v801
        %810 = vst.msk [vmem:[%s378 + $0x10] sm:$0xff] %vm615, %v802
        %811 = vst.msk [vmem:[%s378 + $0x18] sm:$0xff] %vm615, %v803
        %812 = vst.msk [vmem:[%s378 + $0x20] sm:$0xff] %vm615, %v804
        %813 = vst.msk [vmem:[%s378 + $0x28] sm:$0xff] %vm615, %v805
        %814 = vst.msk [vmem:[%s378 + $0x30] sm:$0xff] %vm615, %v806
        %815 = vst.msk [vmem:[%s378 + $0x38] sm:$0xff] %vm615, %v807
        %v817 = vsel %vm615, %v500, 0
        %v820 = vsel %vm615, %v800, 0
        %v823 = vsel %vm615, %v801, 0
        %v826 = vsel %vm615, %v802, 0
        %v829 = vsel %vm615, %v803, 0
        %v832 = vsel %vm615, %v804, 0
        %v835 = vsel %vm615, %v805, 0
        %v838 = vsel %vm615, %v806, 0
        %v841 = vsel %vm615, %v807, 0
        %843 = vmatpush.xpose.msra.mxu0 0.0
        %844 = vmatpush.xpose.msra.mxu0 0.0
        %845 = vmatpush.xpose.msra.mxu0 0.0
        %846 = vmatpush.xpose.msra.mxu0 0.0
        %847 = vmatpush.xpose.msra.mxu0 0.0
        %848 = vmatpush.xpose.msra.mxu0 0.0
        %849 = vmatpush.xpose.msra.mxu0 0.0
        %850 = vmatpush.xpose.msra.mxu0 0.0
        %851 = vmatpush.xpose.msra.mxu0 %v841
        %852 = vmatpush.xpose.msra.mxu0 %v838
        %853 = vmatpush.xpose.msra.mxu0 %v835
        %854 = vmatpush.xpose.msra.mxu0 %v832
        %855 = vmatpush.xpose.msra.mxu0 %v829
        %856 = vmatpush.xpose.msra.mxu0 %v826
        %857 = vmatpush.xpose.msra.mxu0 %v823
        %858 = vmatpush.xpose.msra.mxu0 %v820
        %859 = vmatmul.f32.gmra.mxu0 %v817
        %v860 = vpop.f32.mrf.mxu0
        %v861 = vadd.f32 0.0, %v860
        %862 = vdwg.mxu0
        %863 = vrot.lane.b32.xlu0 %v521, 124
        %v864 = vpop.permute.xlu0 %863
        %865 = vrot.lane.b32.xlu0 %v522, 124
        %v866 = vpop.permute.xlu0 %865
        %867 = vrot.lane.b32.xlu0 %v523, 124
        %v868 = vpop.permute.xlu0 %867
        %869 = vrot.lane.b32.xlu0 %v524, 124
        %v870 = vpop.permute.xlu0 %869
        %871 = vrot.lane.b32.xlu0 %v525, 124
        %v872 = vpop.permute.xlu0 %871
        %873 = vrot.lane.b32.xlu0 %v526, 124
        %v874 = vpop.permute.xlu0 %873
        %875 = vrot.lane.b32.xlu0 %v527, 124
        %v876 = vpop.permute.xlu0 %875
        %877 = vrot.lane.b32.xlu0 %v528, 124
        %v878 = vpop.permute.xlu0 %877
        %v879 = vrot.slane %v494, 4
        %v880 = vsel %vm537, %v864, 0
        %v882 = vsel %vm537, %v866, 0
        %v884 = vsel %vm537, %v868, 0
        %v886 = vsel %vm537, %v870, 0
        %v888 = vsel %vm537, %v872, 0
        %v890 = vsel %vm537, %v874, 0
        %v892 = vsel %vm537, %v876, 0
        %v894 = vsel %vm537, %v878, 0
        %v896 = vsel %vm562, %v879, 0
        %898 = vmatpush.msra.mxu0 0.0
        %899 = vmatpush.msra.mxu0 0.0
        %900 = vmatpush.msra.mxu0 0.0
        %901 = vmatpush.msra.mxu0 0.0
        %902 = vmatpush.msra.mxu0 0.0
        %903 = vmatpush.msra.mxu0 0.0
        %904 = vmatpush.msra.mxu0 0.0
        %905 = vmatpush.msra.mxu0 0.0
        %906 = vmatpush.msra.mxu0 0.0
        %907 = vmatpush.msra.mxu0 0.0
        %908 = vmatpush.msra.mxu0 0.0
        %909 = vmatpush.msra.mxu0 0.0
        %910 = vmatpush.msra.mxu0 0.0
        %911 = vmatpush.msra.mxu0 0.0
        %912 = vmatpush.msra.mxu0 0.0
        %913 = vmatpush.msra.mxu0 %v896
        %914 = vmatmul.f32.gmra.mxu0 %v880
        %v915 = vpop.f32.mrf.mxu0
        %v916 = vadd.f32 0.0, %v915
        %917 = vmatmul.f32.gmra.mxu0 %v882
        %v918 = vpop.f32.mrf.mxu0
        %v919 = vadd.f32 0.0, %v918
        %920 = vmatmul.f32.gmra.mxu0 %v884
        %v921 = vpop.f32.mrf.mxu0
        %v922 = vadd.f32 0.0, %v921
        %923 = vmatmul.f32.gmra.mxu0 %v886
        %v924 = vpop.f32.mrf.mxu0
        %v925 = vadd.f32 0.0, %v924
        %926 = vmatmul.f32.gmra.mxu0 %v888
        %v927 = vpop.f32.mrf.mxu0
        %v928 = vadd.f32 0.0, %v927
        %929 = vmatmul.f32.gmra.mxu0 %v890
        %v930 = vpop.f32.mrf.mxu0
        %v931 = vadd.f32 0.0, %v930
        %932 = vmatmul.f32.gmra.mxu0 %v892
        %v933 = vpop.f32.mrf.mxu0
        %v934 = vadd.f32 0.0, %v933
        %935 = vmatmul.f32.gmra.mxu0 %v894
        %v936 = vpop.f32.mrf.mxu0
        %v937 = vadd.f32 0.0, %v936
        %938 = vdwg.mxu0
        %v939 = vmul.f32 %v916, 0.5
        %v940 = vmul.f32 %v919, 0.5
        %v941 = vmul.f32 %v922, 0.5
        %v942 = vmul.f32 %v925, 0.5
        %v943 = vmul.f32 %v928, 0.5
        %v944 = vmul.f32 %v931, 0.5
        %v945 = vmul.f32 %v934, 0.5
        %v946 = vmul.f32 %v937, 0.5
        %v947 = vsel %vm615, %v939, -inf
        %948 = vmax.xlane.f32.xlu0 %v947
        %v949 = vpop.xlane.xlu0 %948
        %v950 = vsel %vm615, %v940, -inf
        %951 = vmax.xlane.f32.xlu0 %v950
        %v952 = vpop.xlane.xlu0 %951
        %v953 = vsel %vm615, %v941, -inf
        %954 = vmax.xlane.f32.xlu0 %v953
        %v955 = vpop.xlane.xlu0 %954
        %v956 = vsel %vm615, %v942, -inf
        %957 = vmax.xlane.f32.xlu0 %v956
        %v958 = vpop.xlane.xlu0 %957
        %v959 = vsel %vm615, %v943, -inf
        %960 = vmax.xlane.f32.xlu0 %v959
        %v961 = vpop.xlane.xlu0 %960
        %v962 = vsel %vm615, %v944, -inf
        %963 = vmax.xlane.f32.xlu0 %v962
        %v964 = vpop.xlane.xlu0 %963
        %v965 = vsel %vm615, %v945, -inf
        %966 = vmax.xlane.f32.xlu0 %v965
        %v967 = vpop.xlane.xlu0 %966
        %v968 = vsel %vm615, %v946, -inf
        %969 = vmax.xlane.f32.xlu0 %v968
        %v970 = vpop.xlane.xlu0 %969
        %v971 = vsub.f32 %v939, %v949
        %v972 = vsub.f32 %v940, %v952
        %v973 = vsub.f32 %v941, %v955
        %v974 = vsub.f32 %v942, %v958
        %v975 = vsub.f32 %v943, %v961
        %v976 = vsub.f32 %v944, %v964
        %v977 = vsub.f32 %v945, %v967
        %v978 = vsub.f32 %v946, %v970
        %v979 = vmul.f32 %v971, 1.442695
        %v980 = vpow.pop %v979
        %v981 = vmul.f32 %v972, 1.442695
        %v982 = vpow.pop %v981
        %v983 = vmul.f32 %v973, 1.442695
        %v984 = vpow.pop %v983
        %v985 = vmul.f32 %v974, 1.442695
        %v986 = vpow.pop %v985
        %v987 = vmul.f32 %v975, 1.442695
        %v988 = vpow.pop %v987
        %v989 = vmul.f32 %v976, 1.442695
        %v990 = vpow.pop %v989
        %v991 = vmul.f32 %v977, 1.442695
        %v992 = vpow.pop %v991
        %v993 = vmul.f32 %v978, 1.442695
        %v994 = vpow.pop %v993
        %v995 = vsel %vm615, %v980, 0.0
        %996 = vadd.xlane.f32.xlu0 %v995
        %v997 = vpop.xlane.xlu0 %996
        %v998 = vsel %vm615, %v982, 0.0
        %999 = vadd.xlane.f32.xlu0 %v998
        %v1000 = vpop.xlane.xlu0 %999
        %v1001 = vsel %vm615, %v984, 0.0
        %1002 = vadd.xlane.f32.xlu0 %v1001
        %v1003 = vpop.xlane.xlu0 %1002
        %v1004 = vsel %vm615, %v986, 0.0
        %1005 = vadd.xlane.f32.xlu0 %v1004
        %v1006 = vpop.xlane.xlu0 %1005
        %v1007 = vsel %vm615, %v988, 0.0
        %1008 = vadd.xlane.f32.xlu0 %v1007
        %v1009 = vpop.xlane.xlu0 %1008
        %v1010 = vsel %vm615, %v990, 0.0
        %1011 = vadd.xlane.f32.xlu0 %v1010
        %v1012 = vpop.xlane.xlu0 %1011
        %v1013 = vsel %vm615, %v992, 0.0
        %1014 = vadd.xlane.f32.xlu0 %v1013
        %v1015 = vpop.xlane.xlu0 %1014
        %v1016 = vsel %vm615, %v994, 0.0
        %1017 = vadd.xlane.f32.xlu0 %v1016
        %v1018 = vpop.xlane.xlu0 %1017
        %v1019 = vrcp.pop %v997
        %v1020 = vmul.f32 %v997, %v1019
        %v1021 = vsub.f32 1.0, %v1020
        %v1022 = vmul.f32 %v1019, %v1021
        %v1023 = vadd.f32 %v1019, %v1022
        %vm1024 = vweird.f32 %v997
        %vm1025 = vweird.f32 %v1019
        %vm1026 = vmor %vm1024, %vm1025
        %v1027 = vsel %vm1026, %v1019, %v1023
        %v1028 = vand.u32 2147483647, %v997
        %vm1029 = vcmp.eq.f32.partialorder %v1028, 8.507059e+37
        %v1030 = vand.u32 %v997, 2147483648
        %v1031 = vor.u32 1.1754944e-38, %v1030
        %v1032 = vsel %vm1029, %v1031, %v1027
        %v1033 = vrcp.pop %v1000
        %v1034 = vmul.f32 %v1000, %v1033
        %v1035 = vsub.f32 1.0, %v1034
        %v1036 = vmul.f32 %v1033, %v1035
        %v1037 = vadd.f32 %v1033, %v1036
        %vm1038 = vweird.f32 %v1000
        %vm1039 = vweird.f32 %v1033
        %vm1040 = vmor %vm1038, %vm1039
        %v1041 = vsel %vm1040, %v1033, %v1037
        %v1042 = vand.u32 2147483647, %v1000
        %vm1043 = vcmp.eq.f32.partialorder %v1042, 8.507059e+37
        %v1044 = vand.u32 %v1000, 2147483648
        %v1045 = vor.u32 1.1754944e-38, %v1044
        %v1046 = vsel %vm1043, %v1045, %v1041
        %v1047 = vrcp.pop %v1003
        %v1048 = vmul.f32 %v1003, %v1047
        %v1049 = vsub.f32 1.0, %v1048
        %v1050 = vmul.f32 %v1047, %v1049
        %v1051 = vadd.f32 %v1047, %v1050
        %vm1052 = vweird.f32 %v1003
        %vm1053 = vweird.f32 %v1047
        %vm1054 = vmor %vm1052, %vm1053
        %v1055 = vsel %vm1054, %v1047, %v1051
        %v1056 = vand.u32 2147483647, %v1003
        %vm1057 = vcmp.eq.f32.partialorder %v1056, 8.507059e+37
        %v1058 = vand.u32 %v1003, 2147483648
        %v1059 = vor.u32 1.1754944e-38, %v1058
        %v1060 = vsel %vm1057, %v1059, %v1055
        %v1061 = vrcp.pop %v1006
        %v1062 = vmul.f32 %v1006, %v1061
        %v1063 = vsub.f32 1.0, %v1062
        %v1064 = vmul.f32 %v1061, %v1063
        %v1065 = vadd.f32 %v1061, %v1064
        %vm1066 = vweird.f32 %v1006
        %vm1067 = vweird.f32 %v1061
        %vm1068 = vmor %vm1066, %vm1067
        %v1069 = vsel %vm1068, %v1061, %v1065
        %v1070 = vand.u32 2147483647, %v1006
        %vm1071 = vcmp.eq.f32.partialorder %v1070, 8.507059e+37
        %v1072 = vand.u32 %v1006, 2147483648
        %v1073 = vor.u32 1.1754944e-38, %v1072
        %v1074 = vsel %vm1071, %v1073, %v1069
        %v1075 = vrcp.pop %v1009
        %v1076 = vmul.f32 %v1009, %v1075
        %v1077 = vsub.f32 1.0, %v1076
        %v1078 = vmul.f32 %v1075, %v1077
        %v1079 = vadd.f32 %v1075, %v1078
        %vm1080 = vweird.f32 %v1009
        %vm1081 = vweird.f32 %v1075
        %vm1082 = vmor %vm1080, %vm1081
        %v1083 = vsel %vm1082, %v1075, %v1079
        %v1084 = vand.u32 2147483647, %v1009
        %vm1085 = vcmp.eq.f32.partialorder %v1084, 8.507059e+37
        %v1086 = vand.u32 %v1009, 2147483648
        %v1087 = vor.u32 1.1754944e-38, %v1086
        %v1088 = vsel %vm1085, %v1087, %v1083
        %v1089 = vrcp.pop %v1012
        %v1090 = vmul.f32 %v1012, %v1089
        %v1091 = vsub.f32 1.0, %v1090
        %v1092 = vmul.f32 %v1089, %v1091
        %v1093 = vadd.f32 %v1089, %v1092
        %vm1094 = vweird.f32 %v1012
        %vm1095 = vweird.f32 %v1089
        %vm1096 = vmor %vm1094, %vm1095
        %v1097 = vsel %vm1096, %v1089, %v1093
        %v1098 = vand.u32 2147483647, %v1012
        %vm1099 = vcmp.eq.f32.partialorder %v1098, 8.507059e+37
        %v1100 = vand.u32 %v1012, 2147483648
        %v1101 = vor.u32 1.1754944e-38, %v1100
        %v1102 = vsel %vm1099, %v1101, %v1097
        %v1103 = vrcp.pop %v1015
        %v1104 = vmul.f32 %v1015, %v1103
        %v1105 = vsub.f32 1.0, %v1104
        %v1106 = vmul.f32 %v1103, %v1105
        %v1107 = vadd.f32 %v1103, %v1106
        %vm1108 = vweird.f32 %v1015
        %vm1109 = vweird.f32 %v1103
        %vm1110 = vmor %vm1108, %vm1109
        %v1111 = vsel %vm1110, %v1103, %v1107
        %v1112 = vand.u32 2147483647, %v1015
        %vm1113 = vcmp.eq.f32.partialorder %v1112, 8.507059e+37
        %v1114 = vand.u32 %v1015, 2147483648
        %v1115 = vor.u32 1.1754944e-38, %v1114
        %v1116 = vsel %vm1113, %v1115, %v1111
        %v1117 = vrcp.pop %v1018
        %v1118 = vmul.f32 %v1018, %v1117
        %v1119 = vsub.f32 1.0, %v1118
        %v1120 = vmul.f32 %v1117, %v1119
        %v1121 = vadd.f32 %v1117, %v1120
        %vm1122 = vweird.f32 %v1018
        %vm1123 = vweird.f32 %v1117
        %vm1124 = vmor %vm1122, %vm1123
        %v1125 = vsel %vm1124, %v1117, %v1121
        %v1126 = vand.u32 2147483647, %v1018
        %vm1127 = vcmp.eq.f32.partialorder %v1126, 8.507059e+37
        %v1128 = vand.u32 %v1018, 2147483648
        %v1129 = vor.u32 1.1754944e-38, %v1128
        %v1130 = vsel %vm1127, %v1129, %v1125
        %v1131 = vmul.f32 %v980, %v1032
        %v1132 = vmul.f32 %v982, %v1046
        %v1133 = vmul.f32 %v984, %v1060
        %v1134 = vmul.f32 %v986, %v1074
        %v1135 = vmul.f32 %v988, %v1088
        %v1136 = vmul.f32 %v990, %v1102
        %v1137 = vmul.f32 %v992, %v1116
        %v1138 = vmul.f32 %v994, %v1130
        %s1139 = scalar_lea.vmem %s378, 64 [#allocation6]
        %1140 = vst.msk [vmem:[%s1139] sm:$0xff] %vm615, %v1131
        %1141 = vst.msk [vmem:[%s1139 + $0x8] sm:$0xff] %vm615, %v1132
        %1142 = vst.msk [vmem:[%s1139 + $0x10] sm:$0xff] %vm615, %v1133
        %1143 = vst.msk [vmem:[%s1139 + $0x18] sm:$0xff] %vm615, %v1134
        %1144 = vst.msk [vmem:[%s1139 + $0x20] sm:$0xff] %vm615, %v1135
        %1145 = vst.msk [vmem:[%s1139 + $0x28] sm:$0xff] %vm615, %v1136
        %1146 = vst.msk [vmem:[%s1139 + $0x30] sm:$0xff] %vm615, %v1137
        %1147 = vst.msk [vmem:[%s1139 + $0x38] sm:$0xff] %vm615, %v1138
        %v1148 = vrot.slane %v500, 4
        %v1149 = vsel %vm615, %v1148, 0
        %v1152 = vsel %vm615, %v1131, 0
        %v1155 = vsel %vm615, %v1132, 0
        %v1158 = vsel %vm615, %v1133, 0
        %v1161 = vsel %vm615, %v1134, 0
        %v1164 = vsel %vm615, %v1135, 0
        %v1167 = vsel %vm615, %v1136, 0
        %v1170 = vsel %vm615, %v1137, 0
        %v1173 = vsel %vm615, %v1138, 0
        %1175 = vmatpush.xpose.msra.mxu0 0.0
        %1176 = vmatpush.xpose.msra.mxu0 0.0
        %1177 = vmatpush.xpose.msra.mxu0 0.0
        %1178 = vmatpush.xpose.msra.mxu0 0.0
        %1179 = vmatpush.xpose.msra.mxu0 0.0
        %1180 = vmatpush.xpose.msra.mxu0 0.0
        %1181 = vmatpush.xpose.msra.mxu0 0.0
        %1182 = vmatpush.xpose.msra.mxu0 0.0
        %1183 = vmatpush.xpose.msra.mxu0 %v1173
        %1184 = vmatpush.xpose.msra.mxu0 %v1170
        %1185 = vmatpush.xpose.msra.mxu0 %v1167
        %1186 = vmatpush.xpose.msra.mxu0 %v1164
        %1187 = vmatpush.xpose.msra.mxu0 %v1161
        %1188 = vmatpush.xpose.msra.mxu0 %v1158
        %1189 = vmatpush.xpose.msra.mxu0 %v1155
        %1190 = vmatpush.xpose.msra.mxu0 %v1152
        %1191 = vmatmul.f32.gmra.mxu0 %v1149
        %v1192 = vpop.f32.mrf.mxu0
        %v1193 = vadd.f32 0.0, %v1192
        %1194 = vdwg.mxu0
        %1195 = vrot.lane.b32.xlu0 %v521, 120
        %v1196 = vpop.permute.xlu0 %1195
        %1197 = vrot.lane.b32.xlu0 %v522, 120
        %v1198 = vpop.permute.xlu0 %1197
        %1199 = vrot.lane.b32.xlu0 %v523, 120
        %v1200 = vpop.permute.xlu0 %1199
        %1201 = vrot.lane.b32.xlu0 %v524, 120
        %v1202 = vpop.permute.xlu0 %1201
        %1203 = vrot.lane.b32.xlu0 %v525, 120
        %v1204 = vpop.permute.xlu0 %1203
        %1205 = vrot.lane.b32.xlu0 %v526, 120
        %v1206 = vpop.permute.xlu0 %1205
        %1207 = vrot.lane.b32.xlu0 %v527, 120
        %v1208 = vpop.permute.xlu0 %1207
        %1209 = vrot.lane.b32.xlu0 %v528, 120
        %v1210 = vpop.permute.xlu0 %1209
        %v1211 = vsel %vm537, %v1196, 0
        %v1213 = vsel %vm537, %v1198, 0
        %v1215 = vsel %vm537, %v1200, 0
        %v1217 = vsel %vm537, %v1202, 0
        %v1219 = vsel %vm537, %v1204, 0
        %v1221 = vsel %vm537, %v1206, 0
        %v1223 = vsel %vm537, %v1208, 0
        %v1225 = vsel %vm537, %v1210, 0
        %v1228 = vsel %vm562, %v497, 0
        %1230 = vmatpush.msra.mxu0 0.0
        %1231 = vmatpush.msra.mxu0 0.0
        %1232 = vmatpush.msra.mxu0 0.0
        %1233 = vmatpush.msra.mxu0 0.0
        %1234 = vmatpush.msra.mxu0 0.0
        %1235 = vmatpush.msra.mxu0 0.0
        %1236 = vmatpush.msra.mxu0 0.0
        %1237 = vmatpush.msra.mxu0 0.0
        %1238 = vmatpush.msra.mxu0 0.0
        %1239 = vmatpush.msra.mxu0 0.0
        %1240 = vmatpush.msra.mxu0 0.0
        %1241 = vmatpush.msra.mxu0 0.0
        %1242 = vmatpush.msra.mxu0 0.0
        %1243 = vmatpush.msra.mxu0 0.0
        %1244 = vmatpush.msra.mxu0 0.0
        %1245 = vmatpush.msra.mxu0 %v1228
        %1246 = vmatmul.f32.gmra.mxu0 %v1211
        %v1247 = vpop.f32.mrf.mxu0
        %v1248 = vadd.f32 0.0, %v1247
        %1249 = vmatmul.f32.gmra.mxu0 %v1213
        %v1250 = vpop.f32.mrf.mxu0
        %v1251 = vadd.f32 0.0, %v1250
        %1252 = vmatmul.f32.gmra.mxu0 %v1215
        %v1253 = vpop.f32.mrf.mxu0
        %v1254 = vadd.f32 0.0, %v1253
        %1255 = vmatmul.f32.gmra.mxu0 %v1217
        %v1256 = vpop.f32.mrf.mxu0
        %v1257 = vadd.f32 0.0, %v1256
        %1258 = vmatmul.f32.gmra.mxu0 %v1219
        %v1259 = vpop.f32.mrf.mxu0
        %v1260 = vadd.f32 0.0, %v1259
        %1261 = vmatmul.f32.gmra.mxu0 %v1221
        %v1262 = vpop.f32.mrf.mxu0
        %v1263 = vadd.f32 0.0, %v1262
        %1264 = vmatmul.f32.gmra.mxu0 %v1223
        %v1265 = vpop.f32.mrf.mxu0
        %v1266 = vadd.f32 0.0, %v1265
        %1267 = vmatmul.f32.gmra.mxu0 %v1225
        %v1268 = vpop.f32.mrf.mxu0
        %v1269 = vadd.f32 0.0, %v1268
        %1270 = vdwg.mxu0
        %v1271 = vmul.f32 %v1248, 0.5
        %v1272 = vmul.f32 %v1251, 0.5
        %v1273 = vmul.f32 %v1254, 0.5
        %v1274 = vmul.f32 %v1257, 0.5
        %v1275 = vmul.f32 %v1260, 0.5
        %v1276 = vmul.f32 %v1263, 0.5
        %v1277 = vmul.f32 %v1266, 0.5
        %v1278 = vmul.f32 %v1269, 0.5
        %v1279 = vsel %vm615, %v1271, -inf
        %1280 = vmax.xlane.f32.xlu0 %v1279
        %v1281 = vpop.xlane.xlu0 %1280
        %v1282 = vsel %vm615, %v1272, -inf
        %1283 = vmax.xlane.f32.xlu0 %v1282
        %v1284 = vpop.xlane.xlu0 %1283
        %v1285 = vsel %vm615, %v1273, -inf
        %1286 = vmax.xlane.f32.xlu0 %v1285
        %v1287 = vpop.xlane.xlu0 %1286
        %v1288 = vsel %vm615, %v1274, -inf
        %1289 = vmax.xlane.f32.xlu0 %v1288
        %v1290 = vpop.xlane.xlu0 %1289
        %v1291 = vsel %vm615, %v1275, -inf
        %1292 = vmax.xlane.f32.xlu0 %v1291
        %v1293 = vpop.xlane.xlu0 %1292
        %v1294 = vsel %vm615, %v1276, -inf
        %1295 = vmax.xlane.f32.xlu0 %v1294
        %v1296 = vpop.xlane.xlu0 %1295
        %v1297 = vsel %vm615, %v1277, -inf
        %1298 = vmax.xlane.f32.xlu0 %v1297
        %v1299 = vpop.xlane.xlu0 %1298
        %v1300 = vsel %vm615, %v1278, -inf
        %1301 = vmax.xlane.f32.xlu0 %v1300
        %v1302 = vpop.xlane.xlu0 %1301
        %v1303 = vsub.f32 %v1271, %v1281
        %v1304 = vsub.f32 %v1272, %v1284
        %v1305 = vsub.f32 %v1273, %v1287
        %v1306 = vsub.f32 %v1274, %v1290
        %v1307 = vsub.f32 %v1275, %v1293
        %v1308 = vsub.f32 %v1276, %v1296
        %v1309 = vsub.f32 %v1277, %v1299
        %v1310 = vsub.f32 %v1278, %v1302
        %v1311 = vmul.f32 %v1303, 1.442695
        %v1312 = vpow.pop %v1311
        %v1313 = vmul.f32 %v1304, 1.442695
        %v1314 = vpow.pop %v1313
        %v1315 = vmul.f32 %v1305, 1.442695
        %v1316 = vpow.pop %v1315
        %v1317 = vmul.f32 %v1306, 1.442695
        %v1318 = vpow.pop %v1317
        %v1319 = vmul.f32 %v1307, 1.442695
        %v1320 = vpow.pop %v1319
        %v1321 = vmul.f32 %v1308, 1.442695
        %v1322 = vpow.pop %v1321
        %v1323 = vmul.f32 %v1309, 1.442695
        %v1324 = vpow.pop %v1323
        %v1325 = vmul.f32 %v1310, 1.442695
        %v1326 = vpow.pop %v1325
        %v1327 = vsel %vm615, %v1312, 0.0
        %1328 = vadd.xlane.f32.xlu0 %v1327
        %v1329 = vpop.xlane.xlu0 %1328
        %v1330 = vsel %vm615, %v1314, 0.0
        %1331 = vadd.xlane.f32.xlu0 %v1330
        %v1332 = vpop.xlane.xlu0 %1331
        %v1333 = vsel %vm615, %v1316, 0.0
        %1334 = vadd.xlane.f32.xlu0 %v1333
        %v1335 = vpop.xlane.xlu0 %1334
        %v1336 = vsel %vm615, %v1318, 0.0
        %1337 = vadd.xlane.f32.xlu0 %v1336
        %v1338 = vpop.xlane.xlu0 %1337
        %v1339 = vsel %vm615, %v1320, 0.0
        %1340 = vadd.xlane.f32.xlu0 %v1339
        %v1341 = vpop.xlane.xlu0 %1340
        %v1342 = vsel %vm615, %v1322, 0.0
        %1343 = vadd.xlane.f32.xlu0 %v1342
        %v1344 = vpop.xlane.xlu0 %1343
        %v1345 = vsel %vm615, %v1324, 0.0
        %1346 = vadd.xlane.f32.xlu0 %v1345
        %v1347 = vpop.xlane.xlu0 %1346
        %v1348 = vsel %vm615, %v1326, 0.0
        %1349 = vadd.xlane.f32.xlu0 %v1348
        %v1350 = vpop.xlane.xlu0 %1349
        %v1351 = vrcp.pop %v1329
        %v1352 = vmul.f32 %v1329, %v1351
        %v1353 = vsub.f32 1.0, %v1352
        %v1354 = vmul.f32 %v1351, %v1353
        %v1355 = vadd.f32 %v1351, %v1354
        %vm1356 = vweird.f32 %v1329
        %vm1357 = vweird.f32 %v1351
        %vm1358 = vmor %vm1356, %vm1357
        %v1359 = vsel %vm1358, %v1351, %v1355
        %v1360 = vand.u32 2147483647, %v1329
        %vm1361 = vcmp.eq.f32.partialorder %v1360, 8.507059e+37
        %v1362 = vand.u32 %v1329, 2147483648
        %v1363 = vor.u32 1.1754944e-38, %v1362
        %v1364 = vsel %vm1361, %v1363, %v1359
        %v1365 = vrcp.pop %v1332
        %v1366 = vmul.f32 %v1332, %v1365
        %v1367 = vsub.f32 1.0, %v1366
        %v1368 = vmul.f32 %v1365, %v1367
        %v1369 = vadd.f32 %v1365, %v1368
        %vm1370 = vweird.f32 %v1332
        %vm1371 = vweird.f32 %v1365
        %vm1372 = vmor %vm1370, %vm1371
        %v1373 = vsel %vm1372, %v1365, %v1369
        %v1374 = vand.u32 2147483647, %v1332
        %vm1375 = vcmp.eq.f32.partialorder %v1374, 8.507059e+37
        %v1376 = vand.u32 %v1332, 2147483648
        %v1377 = vor.u32 1.1754944e-38, %v1376
        %v1378 = vsel %vm1375, %v1377, %v1373
        %v1379 = vrcp.pop %v1335
        %v1380 = vmul.f32 %v1335, %v1379
        %v1381 = vsub.f32 1.0, %v1380
        %v1382 = vmul.f32 %v1379, %v1381
        %v1383 = vadd.f32 %v1379, %v1382
        %vm1384 = vweird.f32 %v1335
        %vm1385 = vweird.f32 %v1379
        %vm1386 = vmor %vm1384, %vm1385
        %v1387 = vsel %vm1386, %v1379, %v1383
        %v1388 = vand.u32 2147483647, %v1335
        %vm1389 = vcmp.eq.f32.partialorder %v1388, 8.507059e+37
        %v1390 = vand.u32 %v1335, 2147483648
        %v1391 = vor.u32 1.1754944e-38, %v1390
        %v1392 = vsel %vm1389, %v1391, %v1387
        %v1393 = vrcp.pop %v1338
        %v1394 = vmul.f32 %v1338, %v1393
        %v1395 = vsub.f32 1.0, %v1394
        %v1396 = vmul.f32 %v1393, %v1395
        %v1397 = vadd.f32 %v1393, %v1396
        %vm1398 = vweird.f32 %v1338
        %vm1399 = vweird.f32 %v1393
        %vm1400 = vmor %vm1398, %vm1399
        %v1401 = vsel %vm1400, %v1393, %v1397
        %v1402 = vand.u32 2147483647, %v1338
        %vm1403 = vcmp.eq.f32.partialorder %v1402, 8.507059e+37
        %v1404 = vand.u32 %v1338, 2147483648
        %v1405 = vor.u32 1.1754944e-38, %v1404
        %v1406 = vsel %vm1403, %v1405, %v1401
        %v1407 = vrcp.pop %v1341
        %v1408 = vmul.f32 %v1341, %v1407
        %v1409 = vsub.f32 1.0, %v1408
        %v1410 = vmul.f32 %v1407, %v1409
        %v1411 = vadd.f32 %v1407, %v1410
        %vm1412 = vweird.f32 %v1341
        %vm1413 = vweird.f32 %v1407
        %vm1414 = vmor %vm1412, %vm1413
        %v1415 = vsel %vm1414, %v1407, %v1411
        %v1416 = vand.u32 2147483647, %v1341
        %vm1417 = vcmp.eq.f32.partialorder %v1416, 8.507059e+37
        %v1418 = vand.u32 %v1341, 2147483648
        %v1419 = vor.u32 1.1754944e-38, %v1418
        %v1420 = vsel %vm1417, %v1419, %v1415
        %v1421 = vrcp.pop %v1344
        %v1422 = vmul.f32 %v1344, %v1421
        %v1423 = vsub.f32 1.0, %v1422
        %v1424 = vmul.f32 %v1421, %v1423
        %v1425 = vadd.f32 %v1421, %v1424
        %vm1426 = vweird.f32 %v1344
        %vm1427 = vweird.f32 %v1421
        %vm1428 = vmor %vm1426, %vm1427
        %v1429 = vsel %vm1428, %v1421, %v1425
        %v1430 = vand.u32 2147483647, %v1344
        %vm1431 = vcmp.eq.f32.partialorder %v1430, 8.507059e+37
        %v1432 = vand.u32 %v1344, 2147483648
        %v1433 = vor.u32 1.1754944e-38, %v1432
        %v1434 = vsel %vm1431, %v1433, %v1429
        %v1435 = vrcp.pop %v1347
        %v1436 = vmul.f32 %v1347, %v1435
        %v1437 = vsub.f32 1.0, %v1436
        %v1438 = vmul.f32 %v1435, %v1437
        %v1439 = vadd.f32 %v1435, %v1438
        %vm1440 = vweird.f32 %v1347
        %vm1441 = vweird.f32 %v1435
        %vm1442 = vmor %vm1440, %vm1441
        %v1443 = vsel %vm1442, %v1435, %v1439
        %v1444 = vand.u32 2147483647, %v1347
        %vm1445 = vcmp.eq.f32.partialorder %v1444, 8.507059e+37
        %v1446 = vand.u32 %v1347, 2147483648
        %v1447 = vor.u32 1.1754944e-38, %v1446
        %v1448 = vsel %vm1445, %v1447, %v1443
        %v1449 = vrcp.pop %v1350
        %v1450 = vmul.f32 %v1350, %v1449
        %v1451 = vsub.f32 1.0, %v1450
        %v1452 = vmul.f32 %v1449, %v1451
        %v1453 = vadd.f32 %v1449, %v1452
        %vm1454 = vweird.f32 %v1350
        %vm1455 = vweird.f32 %v1449
        %vm1456 = vmor %vm1454, %vm1455
        %v1457 = vsel %vm1456, %v1449, %v1453
        %v1458 = vand.u32 2147483647, %v1350
        %vm1459 = vcmp.eq.f32.partialorder %v1458, 8.507059e+37
        %v1460 = vand.u32 %v1350, 2147483648
        %v1461 = vor.u32 1.1754944e-38, %v1460
        %v1462 = vsel %vm1459, %v1461, %v1457
        %v1463 = vmul.f32 %v1312, %v1364
        %v1464 = vmul.f32 %v1314, %v1378
        %v1465 = vmul.f32 %v1316, %v1392
        %v1466 = vmul.f32 %v1318, %v1406
        %v1467 = vmul.f32 %v1320, %v1420
        %v1468 = vmul.f32 %v1322, %v1434
        %v1469 = vmul.f32 %v1324, %v1448
        %v1470 = vmul.f32 %v1326, %v1462
        %s1471 = scalar_lea.vmem %s378, 128 [#allocation6]
        %1472 = vst.msk [vmem:[%s1471] sm:$0xff] %vm615, %v1463
        %1473 = vst.msk [vmem:[%s1471 + $0x8] sm:$0xff] %vm615, %v1464
        %1474 = vst.msk [vmem:[%s1471 + $0x10] sm:$0xff] %vm615, %v1465
        %1475 = vst.msk [vmem:[%s1471 + $0x18] sm:$0xff] %vm615, %v1466
        %1476 = vst.msk [vmem:[%s1471 + $0x20] sm:$0xff] %vm615, %v1467
        %1477 = vst.msk [vmem:[%s1471 + $0x28] sm:$0xff] %vm615, %v1468
        %1478 = vst.msk [vmem:[%s1471 + $0x30] sm:$0xff] %vm615, %v1469
        %1479 = vst.msk [vmem:[%s1471 + $0x38] sm:$0xff] %vm615, %v1470
        %v1481 = vsel %vm615, %v503, 0
        %v1484 = vsel %vm615, %v1463, 0
        %v1487 = vsel %vm615, %v1464, 0
        %v1490 = vsel %vm615, %v1465, 0
        %v1493 = vsel %vm615, %v1466, 0
        %v1496 = vsel %vm615, %v1467, 0
        %v1499 = vsel %vm615, %v1468, 0
        %v1502 = vsel %vm615, %v1469, 0
        %v1505 = vsel %vm615, %v1470, 0
        %1507 = vmatpush.xpose.msra.mxu0 0.0
        %1508 = vmatpush.xpose.msra.mxu0 0.0
        %1509 = vmatpush.xpose.msra.mxu0 0.0
        %1510 = vmatpush.xpose.msra.mxu0 0.0
        %1511 = vmatpush.xpose.msra.mxu0 0.0
        %1512 = vmatpush.xpose.msra.mxu0 0.0
        %1513 = vmatpush.xpose.msra.mxu0 0.0
        %1514 = vmatpush.xpose.msra.mxu0 0.0
        %1515 = vmatpush.xpose.msra.mxu0 %v1505
        %1516 = vmatpush.xpose.msra.mxu0 %v1502
        %1517 = vmatpush.xpose.msra.mxu0 %v1499
        %1518 = vmatpush.xpose.msra.mxu0 %v1496
        %1519 = vmatpush.xpose.msra.mxu0 %v1493
        %1520 = vmatpush.xpose.msra.mxu0 %v1490
        %1521 = vmatpush.xpose.msra.mxu0 %v1487
        %1522 = vmatpush.xpose.msra.mxu0 %v1484
        %1523 = vmatmul.f32.gmra.mxu0 %v1481
        %v1524 = vpop.f32.mrf.mxu0
        %v1525 = vadd.f32 0.0, %v1524
        %1526 = vdwg.mxu0
        %1527 = vrot.lane.b32.xlu0 %v521, 116
        %v1528 = vpop.permute.xlu0 %1527
        %1529 = vrot.lane.b32.xlu0 %v522, 116
        %v1530 = vpop.permute.xlu0 %1529
        %1531 = vrot.lane.b32.xlu0 %v523, 116
        %v1532 = vpop.permute.xlu0 %1531
        %1533 = vrot.lane.b32.xlu0 %v524, 116
        %v1534 = vpop.permute.xlu0 %1533
        %1535 = vrot.lane.b32.xlu0 %v525, 116
        %v1536 = vpop.permute.xlu0 %1535
        %1537 = vrot.lane.b32.xlu0 %v526, 116
        %v1538 = vpop.permute.xlu0 %1537
        %1539 = vrot.lane.b32.xlu0 %v527, 116
        %v1540 = vpop.permute.xlu0 %1539
        %1541 = vrot.lane.b32.xlu0 %v528, 116
        %v1542 = vpop.permute.xlu0 %1541
        %v1543 = vrot.slane %v497, 4
        %v1544 = vsel %vm537, %v1528, 0
        %v1546 = vsel %vm537, %v1530, 0
        %v1548 = vsel %vm537, %v1532, 0
        %v1550 = vsel %vm537, %v1534, 0
        %v1552 = vsel %vm537, %v1536, 0
        %v1554 = vsel %vm537, %v1538, 0
        %v1556 = vsel %vm537, %v1540, 0
        %v1558 = vsel %vm537, %v1542, 0
        %v1560 = vsel %vm562, %v1543, 0
        %1562 = vmatpush.msra.mxu0 0.0
        %1563 = vmatpush.msra.mxu0 0.0
        %1564 = vmatpush.msra.mxu0 0.0
        %1565 = vmatpush.msra.mxu0 0.0
        %1566 = vmatpush.msra.mxu0 0.0
        %1567 = vmatpush.msra.mxu0 0.0
        %1568 = vmatpush.msra.mxu0 0.0
        %1569 = vmatpush.msra.mxu0 0.0
        %1570 = vmatpush.msra.mxu0 0.0
        %1571 = vmatpush.msra.mxu0 0.0
        %1572 = vmatpush.msra.mxu0 0.0
        %1573 = vmatpush.msra.mxu0 0.0
        %1574 = vmatpush.msra.mxu0 0.0
        %1575 = vmatpush.msra.mxu0 0.0
        %1576 = vmatpush.msra.mxu0 0.0
        %1577 = vmatpush.msra.mxu0 %v1560
        %1578 = vmatmul.f32.gmra.mxu0 %v1544
        %v1579 = vpop.f32.mrf.mxu0
        %v1580 = vadd.f32 0.0, %v1579
        %1581 = vmatmul.f32.gmra.mxu0 %v1546
        %v1582 = vpop.f32.mrf.mxu0
        %v1583 = vadd.f32 0.0, %v1582
        %1584 = vmatmul.f32.gmra.mxu0 %v1548
        %v1585 = vpop.f32.mrf.mxu0
        %v1586 = vadd.f32 0.0, %v1585
        %1587 = vmatmul.f32.gmra.mxu0 %v1550
        %v1588 = vpop.f32.mrf.mxu0
        %v1589 = vadd.f32 0.0, %v1588
        %1590 = vmatmul.f32.gmra.mxu0 %v1552
        %v1591 = vpop.f32.mrf.mxu0
        %v1592 = vadd.f32 0.0, %v1591
        %1593 = vmatmul.f32.gmra.mxu0 %v1554
        %v1594 = vpop.f32.mrf.mxu0
        %v1595 = vadd.f32 0.0, %v1594
        %1596 = vmatmul.f32.gmra.mxu0 %v1556
        %v1597 = vpop.f32.mrf.mxu0
        %v1598 = vadd.f32 0.0, %v1597
        %1599 = vmatmul.f32.gmra.mxu0 %v1558
        %v1600 = vpop.f32.mrf.mxu0
        %v1601 = vadd.f32 0.0, %v1600
        %1602 = vdwg.mxu0
        %v1603 = vmul.f32 %v1580, 0.5
        %v1604 = vmul.f32 %v1583, 0.5
        %v1605 = vmul.f32 %v1586, 0.5
        %v1606 = vmul.f32 %v1589, 0.5
        %v1607 = vmul.f32 %v1592, 0.5
        %v1608 = vmul.f32 %v1595, 0.5
        %v1609 = vmul.f32 %v1598, 0.5
        %v1610 = vmul.f32 %v1601, 0.5
        %v1611 = vsel %vm615, %v1603, -inf
        %1612 = vmax.xlane.f32.xlu0 %v1611
        %v1613 = vpop.xlane.xlu0 %1612
        %v1614 = vsel %vm615, %v1604, -inf
        %1615 = vmax.xlane.f32.xlu0 %v1614
        %v1616 = vpop.xlane.xlu0 %1615
        %v1617 = vsel %vm615, %v1605, -inf
        %1618 = vmax.xlane.f32.xlu0 %v1617
        %v1619 = vpop.xlane.xlu0 %1618
        %v1620 = vsel %vm615, %v1606, -inf
        %1621 = vmax.xlane.f32.xlu0 %v1620
        %v1622 = vpop.xlane.xlu0 %1621
        %v1623 = vsel %vm615, %v1607, -inf
        %1624 = vmax.xlane.f32.xlu0 %v1623
        %v1625 = vpop.xlane.xlu0 %1624
        %v1626 = vsel %vm615, %v1608, -inf
        %1627 = vmax.xlane.f32.xlu0 %v1626
        %v1628 = vpop.xlane.xlu0 %1627
        %v1629 = vsel %vm615, %v1609, -inf
        %1630 = vmax.xlane.f32.xlu0 %v1629
        %v1631 = vpop.xlane.xlu0 %1630
        %v1632 = vsel %vm615, %v1610, -inf
        %1633 = vmax.xlane.f32.xlu0 %v1632
        %v1634 = vpop.xlane.xlu0 %1633
        %v1635 = vsub.f32 %v1603, %v1613
        %v1636 = vsub.f32 %v1604, %v1616
        %v1637 = vsub.f32 %v1605, %v1619
        %v1638 = vsub.f32 %v1606, %v1622
        %v1639 = vsub.f32 %v1607, %v1625
        %v1640 = vsub.f32 %v1608, %v1628
        %v1641 = vsub.f32 %v1609, %v1631
        %v1642 = vsub.f32 %v1610, %v1634
        %v1643 = vmul.f32 %v1635, 1.442695
        %v1644 = vpow.pop %v1643
        %v1645 = vmul.f32 %v1636, 1.442695
        %v1646 = vpow.pop %v1645
        %v1647 = vmul.f32 %v1637, 1.442695
        %v1648 = vpow.pop %v1647
        %v1649 = vmul.f32 %v1638, 1.442695
        %v1650 = vpow.pop %v1649
        %v1651 = vmul.f32 %v1639, 1.442695
        %v1652 = vpow.pop %v1651
        %v1653 = vmul.f32 %v1640, 1.442695
        %v1654 = vpow.pop %v1653
        %v1655 = vmul.f32 %v1641, 1.442695
        %v1656 = vpow.pop %v1655
        %v1657 = vmul.f32 %v1642, 1.442695
        %v1658 = vpow.pop %v1657
        %v1659 = vsel %vm615, %v1644, 0.0
        %1660 = vadd.xlane.f32.xlu0 %v1659
        %v1661 = vpop.xlane.xlu0 %1660
        %v1662 = vsel %vm615, %v1646, 0.0
        %1663 = vadd.xlane.f32.xlu0 %v1662
        %v1664 = vpop.xlane.xlu0 %1663
        %v1665 = vsel %vm615, %v1648, 0.0
        %1666 = vadd.xlane.f32.xlu0 %v1665
        %v1667 = vpop.xlane.xlu0 %1666
        %v1668 = vsel %vm615, %v1650, 0.0
        %1669 = vadd.xlane.f32.xlu0 %v1668
        %v1670 = vpop.xlane.xlu0 %1669
        %v1671 = vsel %vm615, %v1652, 0.0
        %1672 = vadd.xlane.f32.xlu0 %v1671
        %v1673 = vpop.xlane.xlu0 %1672
        %v1674 = vsel %vm615, %v1654, 0.0
        %1675 = vadd.xlane.f32.xlu0 %v1674
        %v1676 = vpop.xlane.xlu0 %1675
        %v1677 = vsel %vm615, %v1656, 0.0
        %1678 = vadd.xlane.f32.xlu0 %v1677
        %v1679 = vpop.xlane.xlu0 %1678
        %v1680 = vsel %vm615, %v1658, 0.0
        %1681 = vadd.xlane.f32.xlu0 %v1680
        %v1682 = vpop.xlane.xlu0 %1681
        %v1683 = vrcp.pop %v1661
        %v1684 = vmul.f32 %v1661, %v1683
        %v1685 = vsub.f32 1.0, %v1684
        %v1686 = vmul.f32 %v1683, %v1685
        %v1687 = vadd.f32 %v1683, %v1686
        %vm1688 = vweird.f32 %v1661
        %vm1689 = vweird.f32 %v1683
        %vm1690 = vmor %vm1688, %vm1689
        %v1691 = vsel %vm1690, %v1683, %v1687
        %v1692 = vand.u32 2147483647, %v1661
        %vm1693 = vcmp.eq.f32.partialorder %v1692, 8.507059e+37
        %v1694 = vand.u32 %v1661, 2147483648
        %v1695 = vor.u32 1.1754944e-38, %v1694
        %v1696 = vsel %vm1693, %v1695, %v1691
        %v1697 = vrcp.pop %v1664
        %v1698 = vmul.f32 %v1664, %v1697
        %v1699 = vsub.f32 1.0, %v1698
        %v1700 = vmul.f32 %v1697, %v1699
        %v1701 = vadd.f32 %v1697, %v1700
        %vm1702 = vweird.f32 %v1664
        %vm1703 = vweird.f32 %v1697
        %vm1704 = vmor %vm1702, %vm1703
        %v1705 = vsel %vm1704, %v1697, %v1701
        %v1706 = vand.u32 2147483647, %v1664
        %vm1707 = vcmp.eq.f32.partialorder %v1706, 8.507059e+37
        %v1708 = vand.u32 %v1664, 2147483648
        %v1709 = vor.u32 1.1754944e-38, %v1708
        %v1710 = vsel %vm1707, %v1709, %v1705
        %v1711 = vrcp.pop %v1667
        %v1712 = vmul.f32 %v1667, %v1711
        %v1713 = vsub.f32 1.0, %v1712
        %v1714 = vmul.f32 %v1711, %v1713
        %v1715 = vadd.f32 %v1711, %v1714
        %vm1716 = vweird.f32 %v1667
        %vm1717 = vweird.f32 %v1711
        %vm1718 = vmor %vm1716, %vm1717
        %v1719 = vsel %vm1718, %v1711, %v1715
        %v1720 = vand.u32 2147483647, %v1667
        %vm1721 = vcmp.eq.f32.partialorder %v1720, 8.507059e+37
        %v1722 = vand.u32 %v1667, 2147483648
        %v1723 = vor.u32 1.1754944e-38, %v1722
        %v1724 = vsel %vm1721, %v1723, %v1719
        %v1725 = vrcp.pop %v1670
        %v1726 = vmul.f32 %v1670, %v1725
        %v1727 = vsub.f32 1.0, %v1726
        %v1728 = vmul.f32 %v1725, %v1727
        %v1729 = vadd.f32 %v1725, %v1728
        %vm1730 = vweird.f32 %v1670
        %vm1731 = vweird.f32 %v1725
        %vm1732 = vmor %vm1730, %vm1731
        %v1733 = vsel %vm1732, %v1725, %v1729
        %v1734 = vand.u32 2147483647, %v1670
        %vm1735 = vcmp.eq.f32.partialorder %v1734, 8.507059e+37
        %v1736 = vand.u32 %v1670, 2147483648
        %v1737 = vor.u32 1.1754944e-38, %v1736
        %v1738 = vsel %vm1735, %v1737, %v1733
        %v1739 = vrcp.pop %v1673
        %v1740 = vmul.f32 %v1673, %v1739
        %v1741 = vsub.f32 1.0, %v1740
        %v1742 = vmul.f32 %v1739, %v1741
        %v1743 = vadd.f32 %v1739, %v1742
        %vm1744 = vweird.f32 %v1673
        %vm1745 = vweird.f32 %v1739
        %vm1746 = vmor %vm1744, %vm1745
        %v1747 = vsel %vm1746, %v1739, %v1743
        %v1748 = vand.u32 2147483647, %v1673
        %vm1749 = vcmp.eq.f32.partialorder %v1748, 8.507059e+37
        %v1750 = vand.u32 %v1673, 2147483648
        %v1751 = vor.u32 1.1754944e-38, %v1750
        %v1752 = vsel %vm1749, %v1751, %v1747
        %v1753 = vrcp.pop %v1676
        %v1754 = vmul.f32 %v1676, %v1753
        %v1755 = vsub.f32 1.0, %v1754
        %v1756 = vmul.f32 %v1753, %v1755
        %v1757 = vadd.f32 %v1753, %v1756
        %vm1758 = vweird.f32 %v1676
        %vm1759 = vweird.f32 %v1753
        %vm1760 = vmor %vm1758, %vm1759
        %v1761 = vsel %vm1760, %v1753, %v1757
        %v1762 = vand.u32 2147483647, %v1676
        %vm1763 = vcmp.eq.f32.partialorder %v1762, 8.507059e+37
        %v1764 = vand.u32 %v1676, 2147483648
        %v1765 = vor.u32 1.1754944e-38, %v1764
        %v1766 = vsel %vm1763, %v1765, %v1761
        %v1767 = vrcp.pop %v1679
        %v1768 = vmul.f32 %v1679, %v1767
        %v1769 = vsub.f32 1.0, %v1768
        %v1770 = vmul.f32 %v1767, %v1769
        %v1771 = vadd.f32 %v1767, %v1770
        %vm1772 = vweird.f32 %v1679
        %vm1773 = vweird.f32 %v1767
        %vm1774 = vmor %vm1772, %vm1773
        %v1775 = vsel %vm1774, %v1767, %v1771
        %v1776 = vand.u32 2147483647, %v1679
        %vm1777 = vcmp.eq.f32.partialorder %v1776, 8.507059e+37
        %v1778 = vand.u32 %v1679, 2147483648
        %v1779 = vor.u32 1.1754944e-38, %v1778
        %v1780 = vsel %vm1777, %v1779, %v1775
        %v1781 = vrcp.pop %v1682
        %v1782 = vmul.f32 %v1682, %v1781
        %v1783 = vsub.f32 1.0, %v1782
        %v1784 = vmul.f32 %v1781, %v1783
        %v1785 = vadd.f32 %v1781, %v1784
        %vm1786 = vweird.f32 %v1682
        %vm1787 = vweird.f32 %v1781
        %vm1788 = vmor %vm1786, %vm1787
        %v1789 = vsel %vm1788, %v1781, %v1785
        %v1790 = vand.u32 2147483647, %v1682
        %vm1791 = vcmp.eq.f32.partialorder %v1790, 8.507059e+37
        %v1792 = vand.u32 %v1682, 2147483648
        %v1793 = vor.u32 1.1754944e-38, %v1792
        %v1794 = vsel %vm1791, %v1793, %v1789
        %v1795 = vmul.f32 %v1644, %v1696
        %v1796 = vmul.f32 %v1646, %v1710
        %v1797 = vmul.f32 %v1648, %v1724
        %v1798 = vmul.f32 %v1650, %v1738
        %v1799 = vmul.f32 %v1652, %v1752
        %v1800 = vmul.f32 %v1654, %v1766
        %v1801 = vmul.f32 %v1656, %v1780
        %v1802 = vmul.f32 %v1658, %v1794
        %s1803 = scalar_lea.vmem %s378, 192 [#allocation6]
        %1804 = vst.msk [vmem:[%s1803] sm:$0xff] %vm615, %v1795
        %1805 = vst.msk [vmem:[%s1803 + $0x8] sm:$0xff] %vm615, %v1796
        %1806 = vst.msk [vmem:[%s1803 + $0x10] sm:$0xff] %vm615, %v1797
        %1807 = vst.msk [vmem:[%s1803 + $0x18] sm:$0xff] %vm615, %v1798
        %1808 = vst.msk [vmem:[%s1803 + $0x20] sm:$0xff] %vm615, %v1799
        %1809 = vst.msk [vmem:[%s1803 + $0x28] sm:$0xff] %vm615, %v1800
        %1810 = vst.msk [vmem:[%s1803 + $0x30] sm:$0xff] %vm615, %v1801
        %1811 = vst.msk [vmem:[%s1803 + $0x38] sm:$0xff] %vm615, %v1802
        %v1812 = vrot.slane %v503, 4
        %v1813 = vsel %vm615, %v1812, 0
        %v1816 = vsel %vm615, %v1795, 0
        %v1819 = vsel %vm615, %v1796, 0
        %v1822 = vsel %vm615, %v1797, 0
        %v1825 = vsel %vm615, %v1798, 0
        %v1828 = vsel %vm615, %v1799, 0
        %v1831 = vsel %vm615, %v1800, 0
        %v1834 = vsel %vm615, %v1801, 0
        %v1837 = vsel %vm615, %v1802, 0
        %1839 = vmatpush.xpose.msra.mxu0 0.0
        %1840 = vmatpush.xpose.msra.mxu0 0.0
        %1841 = vmatpush.xpose.msra.mxu0 0.0
        %1842 = vmatpush.xpose.msra.mxu0 0.0
        %1843 = vmatpush.xpose.msra.mxu0 0.0
        %1844 = vmatpush.xpose.msra.mxu0 0.0
        %1845 = vmatpush.xpose.msra.mxu0 0.0
        %1846 = vmatpush.xpose.msra.mxu0 0.0
        %1847 = vmatpush.xpose.msra.mxu0 %v1837
        %1848 = vmatpush.xpose.msra.mxu0 %v1834
        %1849 = vmatpush.xpose.msra.mxu0 %v1831
        %1850 = vmatpush.xpose.msra.mxu0 %v1828
        %1851 = vmatpush.xpose.msra.mxu0 %v1825
        %1852 = vmatpush.xpose.msra.mxu0 %v1822
        %1853 = vmatpush.xpose.msra.mxu0 %v1819
        %1854 = vmatpush.xpose.msra.mxu0 %v1816
        %1855 = vmatmul.f32.gmra.mxu0 %v1813
        %v1856 = vpop.f32.mrf.mxu0
        %v1857 = vadd.f32 0.0, %v1856
        %1858 = vdwg.mxu0
        %v1860 = vrot.slane %v1193, 4
        %v1863 = vrot.slane %v1857, 4
        %v1865 = vsel %vm562, %v861, %v1860
        %v1866 = vsel %vm562, %v1525, %v1863
        %v1867 = vld [vmem:[%s6] sm:$0xff]
        %v1868 = vld [vmem:[%s6 + $0x8] sm:$0xff]
        %v1869 = vld [vmem:[%s6 + $0x10] sm:$0xff]
        %v1870 = vld [vmem:[%s6 + $0x18] sm:$0xff]
        %v1871 = vld [vmem:[%s7] sm:$0xff]
        %v1872 = vld [vmem:[%s7 + $0x8] sm:$0xff]
        %v1873 = vld [vmem:[%s7 + $0x10] sm:$0xff]
        %v1874 = vld [vmem:[%s7 + $0x18] sm:$0xff]
        %1876 = vset.pattern.permute.xlu0 0
        %1877 = vperm.xlu0 %1876, %v1871
        %v1878 = vpop.permute.xlu0 %1877
        %1881 = vset.pattern.permute.xlu0 0
        %1882 = vperm.xlu0 %1881, %v1872
        %v1883 = vpop.permute.xlu0 %1882
        %1886 = vset.pattern.permute.xlu0 0
        %1887 = vperm.xlu0 %1886, %v1873
        %v1888 = vpop.permute.xlu0 %1887
        %1891 = vset.pattern.permute.xlu0 0
        %1892 = vperm.xlu0 %1891, %v1874
        %v1893 = vpop.permute.xlu0 %1892
        %vm1895 = vcmask 130048
        %v1897 = vsel %vm1895, %v1867, 0
        %v1900 = vsel %vm1895, %v1868, 0
        %v1903 = vsel %vm1895, %v1869, 0
        %v1906 = vsel %vm1895, %v1870, 0
        %1908 = vmatpush.msra.mxu0 0.0
        %1909 = vmatpush.msra.mxu0 0.0
        %1910 = vmatpush.msra.mxu0 0.0
        %1911 = vmatpush.msra.mxu0 0.0
        %1912 = vmatpush.msra.mxu0 0.0
        %1913 = vmatpush.msra.mxu0 0.0
        %1914 = vmatpush.msra.mxu0 0.0
        %1915 = vmatpush.msra.mxu0 0.0
        %1916 = vmatpush.msra.mxu0 0.0
        %1917 = vmatpush.msra.mxu0 0.0
        %1918 = vmatpush.msra.mxu0 0.0
        %1919 = vmatpush.msra.mxu0 0.0
        %1920 = vmatpush.msra.mxu0 0.0
        %1921 = vmatpush.msra.mxu0 0.0
        %1922 = vmatpush.msra.mxu0 %v1866
        %1923 = vmatpush.msra.mxu0 %v1865
        %1924 = vmatmul.f32.gmra.mxu0 %v1897
        %v1925 = vpop.f32.mrf.mxu0
        %v1926 = vadd.f32 %v1878, %v1925
        %1927 = vmatmul.f32.gmra.mxu0 %v1900
        %v1928 = vpop.f32.mrf.mxu0
        %v1929 = vadd.f32 %v1883, %v1928
        %1930 = vmatmul.f32.gmra.mxu0 %v1903
        %v1931 = vpop.f32.mrf.mxu0
        %v1932 = vadd.f32 %v1888, %v1931
        %1933 = vmatmul.f32.gmra.mxu0 %v1906
        %v1934 = vpop.f32.mrf.mxu0
        %v1935 = vadd.f32 %v1893, %v1934
        %1936 = vdwg.mxu0
        %1937 = vst.msk [vmem:[%s371] sm:$0xff] %vm615, %v1926
        %1938 = vst.msk [vmem:[%s371 + $0x8] sm:$0xff] %vm615, %v1929
        %1939 = vst.msk [vmem:[%s371 + $0x10] sm:$0xff] %vm615, %v1932
        %1940 = vst.msk [vmem:[%s371 + $0x18] sm:$0xff] %vm615, %v1935
        %s1941 = sand.u32 %s216, 1
        %s1942 = scalar_lea.sflag [#allocation4], %s1941
        %s1943 = sand.u32 %s216, 1
        %s1944 = smul.addr %s1943, 32
        %s1945 = scalar_lea.vmem [#allocation5], %s1944
        %s1946 = sand.u32 %s242, 1
        %s1947 = scalar_lea.sflag [#allocation7], %s1946
        %s1948 = sand.u32 %s242, 1
        %s1949 = smul.addr %s1948, 256
        %s1950 = scalar_lea.vmem [#allocation6], %s1949
        // Predicated region
        $region57: #{tpu_custom_call.1} parent=51 // pred_check
          %p1951 = pneg %p226
        $region58: #{tpu_custom_call.1} parent=51 // pred_check_branch
          %1953 = sbr.rel (%p1951) target = $region60
        $region59: #{tpu_custom_call.1} parent=51 // pred_region
          %1955 = vsyncadd %s1942, 0
          %s1956 = smul.addr %s30, 4
          %s1957 = smul.addr %s1956, 8
          %s1958 = scalar_lea.hbm %s8, %s1957
          %s1959 = sshll.u32 %s1945, 4
          %s1960 = int_to_ptr.vmem [resolvable:$true] %s1959
          %s1961 = sshll.u32 %s1958, 4
          %s1962 = int_to_ptr.hbm [resolvable:$true] %s1961
          %1967 = dma.vmem_to_hbm [thread:$0]  %s1960, 512, %s1962, %s1942, 128, 128, 8
        $region60: #{tpu_custom_call.1} parent=51 // pred_fallthru
          _
        // Predicated region
        $region61: #{tpu_custom_call.1} parent=51 // pred_check
          %p1968 = pneg %p252
        $region62: #{tpu_custom_call.1} parent=51 // pred_check_branch
          %1970 = sbr.rel (%p1968) target = $region64
        $region63: #{tpu_custom_call.1} parent=51 // pred_region
          %1972 = vsyncadd %s1947, 0
          %s1973 = smul.addr %s30, 32
          %s1974 = smul.addr %s1973, 8
          %s1975 = scalar_lea.hbm %s9, %s1974
          %s1976 = sshll.u32 %s1950, 4
          %s1977 = int_to_ptr.vmem [resolvable:$true] %s1976
          %s1978 = sshll.u32 %s1975, 4
          %s1979 = int_to_ptr.hbm [resolvable:$true] %s1978
          %1984 = dma.vmem_to_hbm [thread:$0]  %s1977, 4096, %s1979, %s1947, 128, 128, 8
        $region64: #{tpu_custom_call.1} parent=51 // pred_fallthru
          _
      $region52: #{tpu_custom_call.1} parent=5 // pred_fallthru
        _
      %p1985 = scmp.le.s32.totalorder 2, %s25
      // Predicated region
      $region65: #{tpu_custom_call.1} parent=5 // pred_check
        %p1986 = pneg %p1985
      $region66: #{tpu_custom_call.1} parent=5 // pred_check_branch
        %1988 = sbr.rel (%p1986) target = $region68
      $region67: #{tpu_custom_call.1} parent=5 // pred_region
        %s1989 = ssub.s32 %s25, 2
        // Predicated region
        $region69: #{tpu_custom_call.1} parent=67 // pred_check
          %p1990 = pneg %p232
        $region70: #{tpu_custom_call.1} parent=67 // pred_check_branch
          %1992 = sbr.rel (%p1990) target = $region72
        $region71: #{tpu_custom_call.1} parent=67 // pred_region
          %s1993 = sand.u32 %s217, 1
          %s1994 = scalar_lea.sflag [#allocation4], %s1993
          %s1995 = sand.u32 %s217, 1
          %s1996 = smul.addr %s1995, 32
          %s1997 = scalar_lea.vmem [#allocation5], %s1996
          %1999 = dma.done %s1994, 512
        $region72: #{tpu_custom_call.1} parent=67 // pred_fallthru
          _
        // Predicated region
        $region73: #{tpu_custom_call.1} parent=67 // pred_check
          %p2000 = pneg %p258
        $region74: #{tpu_custom_call.1} parent=67 // pred_check_branch
          %2002 = sbr.rel (%p2000) target = $region76
        $region75: #{tpu_custom_call.1} parent=67 // pred_region
          %s2003 = sand.u32 %s243, 1
          %s2004 = scalar_lea.sflag [#allocation7], %s2003
          %s2005 = sand.u32 %s243, 1
          %s2006 = smul.addr %s2005, 256
          %s2007 = scalar_lea.vmem [#allocation6], %s2006
          %2009 = dma.done %s2004, 4096
        $region76: #{tpu_custom_call.1} parent=67 // pred_fallthru
          _
      $region68: #{tpu_custom_call.1} parent=5 // pred_fallthru
        _
    $region6: #{tpu_custom_call.1} parent=1 // loop_footer
      %s29 = sadd.s32 1, %s25
    $region7: #{tpu_custom_call.1} parent=1 // loop_footer_branch
      %24 = sbr.rel target = $region3
    $region8: #{tpu_custom_call.1} parent=1 // loop_exit
      _
    %2010 = vsyncpa [#allocation3], 1
    %s2011 = scalar_lea.sflag [#allocation3], 1
    %2012 = vsyncpa %s2011, 1
    %2013 = vsyncpa [#allocation4], 1
    %s2014 = scalar_lea.sflag [#allocation4], 1
    %2015 = vsyncpa %s2014, 1
    %2016 = vsyncpa [#allocation7], 1
    %s2017 = scalar_lea.sflag [#allocation7], 1
    %2018 = vsyncpa %s2017, 1

</llo_original>
